<compile_context>
chip_gen: v5e
topology: v5e:2x2
jax: 0.10.0
libtpu: 0.0.40
codegen_flags: <defaults>
</compile_context>

<pallas_src>
import numpy as np
import jax
import jax.numpy as jnp
from jax.experimental import pallas as pl
from jax.experimental.pallas import tpu as pltpu

BETA = 0.9     # LIF leak factor
THR = 1.0      # LIF firing threshold
BN_EPS = 1e-5
K_EXTRA = 8    # extra sublane-aligned K rows appended to each patches scratch
               # (row 0 of the extra block is the constant-1 row for BN shift)


# ----------------------------------------------------------------------------
# Host-side constant prep (tiny; pure layout plumbing)
# ----------------------------------------------------------------------------
def _ceil8(n):
    return ((n + 7) // 8) * 8


def _tap_masks(H, W, nb):
    """(9, nb*H*W) f32 masks: 1 where the 3x3 tap's source pixel is in-image.

    Built once on the host (review: don't rebuild iota/where constants in the
    kernel every grid step).  Masks also kill the roll wrap-around between
    adjacent batch images in the folded lane axis.
    """
    ii, jj = np.divmod(np.arange(H * W), W)
    rows = []
    for dh in (-1, 0, 1):
        for dw in (-1, 0, 1):
            m = ((ii + dh >= 0) & (ii + dh < H) &
                 (jj + dw >= 0) & (jj + dw < W)).astype(np.float32)
            rows.append(m)
    m = np.stack(rows)                            # (9, H*W)
    return jnp.asarray(np.tile(m, (1, nb)))       # (9, nb*H*W)


def _pool_matrix(H, W, nb):
    """Block-diagonal (nb*H*W, nb*Ho*Wo) 0.25 matrix: 2x2 avg pool as one matmul."""
    Ho, Wo = H // 2, W // 2
    p = np.zeros((H * W, Ho * Wo), np.float32)
    idx = np.arange(H * W)
    ii, jj = np.divmod(idx, W)
    p[idx, (ii // 2) * Wo + (jj // 2)] = 0.25
    full = np.zeros((nb * H * W, nb * Ho * Wo), np.float32)
    for b in range(nb):
        full[b * H * W:(b + 1) * H * W, b * Ho * Wo:(b + 1) * Ho * Wo] = p
    return jnp.asarray(full)


def fold_params(raw):
    """Fold BN scale into conv weights, pad Cin to a multiple of 8, flatten to
    (Cout, 9*Cin_pad + K_EXTRA) with row order (kh, kw, cin); the first extra
    column carries the BN shift (multiplied by a constant-1 patches row)."""
    def fold(w_hwio, scale, shift):
        kh, kw, cin, cout = w_hwio.shape
        cin_pad = _ceil8(cin)
        w = w_hwio * scale[None, None, None, :]
        w = jnp.transpose(w, (3, 0, 1, 2))                       # (cout,kh,kw,cin)
        if cin_pad > cin:
            w = jnp.pad(w, ((0, 0), (0, 0), (0, 0), (0, cin_pad - cin)))
        w = w.reshape(cout, kh * kw * cin_pad)
        extra = jnp.zeros((cout, K_EXTRA), jnp.float32).at[:, 0].set(shift)
        return jnp.concatenate([w, extra], axis=1)

    return {
        "w1f": fold(raw["w1"], raw["scale1"], raw["shift1"]),
        "w2f": fold(raw["w2"], raw["scale2"], raw["shift2"]),
    }


# ----------------------------------------------------------------------------
# Fused kernel: conv1+BN+LIF -> 2x2 avg pool -> conv2+BN+LIF, nb batch elems
# per grid step, everything lane-dense (channels on sublanes, nb*pixels on lanes)
# ----------------------------------------------------------------------------
def make_neck_kernel(H, W):
    Ho, Wo = H // 2, W // 2
    OFFS = [(dh, dw) for dh in (-1, 0, 1) for dw in (-1, 0, 1)]

    def kernel(x_ref, w1_ref, w2_ref, m1_ref, m2_ref, pool_ref,
               v1_ref, v2_ref,
               y1_ref, y2_ref, v1o_ref, v2o_ref,
               p1_ref, p2_ref):
        # x_ref   : (Cin_pad, N1)            input, N1 = nb*H*W
        # w1_ref  : (C1, 9*Cin_pad+K_EXTRA)  conv1 weights (BN scale/shift folded)
        # w2_ref  : (C2, 9*C1+K_EXTRA)       conv2 weights
        # m1_ref  : (9, N1)                  per-tap border masks, stage 1
        # m2_ref  : (9, N2)                  per-tap border masks, stage 2
        # pool_ref: (N1, N2)                 2x2 avg-pool matrix, N2 = nb*Ho*Wo
        # v1_ref  : (C1, N1)  v2_ref: (C2, N2)   previous LIF states
        # y*_ref / v*o_ref : spike maps / new states (same shapes as states)
        # p1_ref  : (9*Cin_pad+K_EXTRA, N1)  patches scratch, conv1
        # p2_ref  : (9*C1+K_EXTRA, N2)       patches scratch, conv2
        cin_p = x_ref.shape[0]
        n1 = x_ref.shape[1]
        c1 = w1_ref.shape[0]
        n2 = v2_ref.shape[1]
        k1 = 9 * cin_p
        k2 = 9 * c1

        # One-time init of the constant extra K rows (row 0 of each block = 1.0,
        # used to add the folded BN shift inside the matmul).  These rows are
        # never touched by the per-step tap writes, so zero them only once.
        @pl.when(pl.program_id(0) == 0)
        def _():
            p1_ref[pl.ds(k1, K_EXTRA), :] = jnp.zeros((K_EXTRA, n1), jnp.float32)
            p1_ref[pl.ds(k1, 1), :] = jnp.ones((1, n1), jnp.float32)
            p2_ref[pl.ds(k2, K_EXTRA), :] = jnp.zeros((K_EXTRA, n2), jnp.float32)
            p2_ref[pl.ds(k2, 1), :] = jnp.ones((1, n2), jnp.float32)

        # ---- conv1 im2col: lane rolls (XLU) + border masks, sublane-aligned
        #      writes into the patches scratch.  No padded scratch, no concat.
        x = x_ref[...]                                        # (cin_p, n1)
        for t, (dh, dw) in enumerate(OFFS):
            d = dh * W + dw
            src = x if d == 0 else pltpu.roll(x, (-d) % n1, axis=1)
            p1_ref[pl.ds(t * cin_p, cin_p), :] = src * m1_ref[pl.ds(t, 1), :]

        z1 = jnp.dot(w1_ref[...], p1_ref[...],
                     preferred_element_type=jnp.float32)      # (c1, n1)

        # ---- LIF 1 ---------------------------------------------------------
        v1 = BETA * v1_ref[...] + z1
        fired1 = v1 >= THR
        y1 = fired1.astype(jnp.float32)
        y1_ref[...] = y1                                      # lane-dense store
        v1o_ref[...] = jnp.where(fired1, 0.0, v1)

        # ---- 2x2 avg pool: one matmul with the host-built 0.25 matrix -------
        p1v = jnp.dot(y1, pool_ref[...],
                      preferred_element_type=jnp.float32)     # (c1, n2)

        # ---- conv2 im2col (same roll+mask scheme on the pooled map) ---------
        for t, (dh, dw) in enumerate(OFFS):
            d = dh * Wo + dw
            src = p1v if d == 0 else pltpu.roll(p1v, (-d) % n2, axis=1)
            p2_ref[pl.ds(t * c1, c1), :] = src * m2_ref[pl.ds(t, 1), :]

        z2 = jnp.dot(w2_ref[...], p2_ref[...],
                     preferred_element_type=jnp.float32)      # (c2, n2)

        # ---- LIF 2 ---------------------------------------------------------
        v2 = BETA * v2_ref[...] + z2
        fired2 = v2 >= THR
        y2_ref[...] = fired2.astype(jnp.float32)
        v2o_ref[...] = jnp.where(fired2, 0.0, v2)

    return kernel


# ----------------------------------------------------------------------------
# NeckGen forward: one fused pallas_call.  Returns ([feat1, feat2], state)
# like the torch module (features and states in NCHW).
# ----------------------------------------------------------------------------
def neck_forward(x_nchw, params, state=None, nb=None):
    B, Cin, H, W = x_nchw.shape
    Ho, Wo = H // 2, W // 2
    HW, HoWo = H * W, Ho * Wo
    C1 = params["w1f"].shape[0]
    C2 = params["w2f"].shape[0]
    K1p = params["w1f"].shape[1]
    K2p = params["w2f"].shape[1]
    cin_pad = (K1p - K_EXTRA) // 9

    if nb is None:
        # Lane-dense stage-2 stores / matmul N want nb*Ho*Wo >= 128.
        # On v7x with larger B, pass nb=B//2 so both TensorCores get a grid step.
        nb = 1
        while nb < B and nb * HoWo < 128:
            nb *= 2
    assert B % nb == 0, "batch must be divisible by nb"
    steps = B // nb
    N1, N2 = nb * HW, nb * HoWo

    # ---- host-side layout prep (tiny tensors; pure plumbing) ----------------
    # NCHW -> channel-major lane-dense (Cin_pad, B*H*W)
    x_cb = jnp.transpose(x_nchw.reshape(B, Cin, HW), (1, 0, 2)).reshape(Cin, B * HW)
    x_cb = jnp.pad(x_cb, ((0, cin_pad - Cin), (0, 0)))

    if state is None:
        v1 = jnp.zeros((C1, B * HW), jnp.float32)
        v2 = jnp.zeros((C2, B * HoWo), jnp.float32)
    else:
        v1_nchw, v2_nchw = state
        v1 = jnp.transpose(v1_nchw.reshape(B, C1, HW), (1, 0, 2)).reshape(C1, B * HW)
        v2 = jnp.transpose(v2_nchw.reshape(B, C2, HoWo), (1, 0, 2)).reshape(C2, B * HoWo)

    m1 = _tap_masks(H, W, nb)        # (9, N1)
    m2 = _tap_masks(Ho, Wo, nb)      # (9, N2)
    pool = _pool_matrix(H, W, nb)    # (N1, N2)

    inputs = (x_cb, params["w1f"], params["w2f"], m1, m2, pool, v1, v2)
    n_out_elems = 2 * (C1 * B * HW + C2 * B * HoWo)
    cost = pl.CostEstimate(
        flops=2 * B * (HW * K1p * C1 + HW * HoWo * C1 + HoWo * K2p * C2),
        transcendentals=0,
        bytes_accessed=4 * (sum(int(a.size) for a in inputs) + n_out_elems),
    )

    kernel = make_neck_kernel(H, W)

    y1, y2, v1n, v2n = pl.pallas_call(
        kernel,
        out_shape=(
            jax.ShapeDtypeStruct((C1, B * HW), jnp.float32),
            jax.ShapeDtypeStruct((C2, B * HoWo), jnp.float32),
            jax.ShapeDtypeStruct((C1, B * HW), jnp.float32),
            jax.ShapeDtypeStruct((C2, B * HoWo), jnp.float32),
        ),
        grid=(steps,),
        in_specs=[
            pl.BlockSpec((cin_pad, N1), lambda g: (0, g)),
            pl.BlockSpec((C1, K1p), lambda g: (0, 0)),
            pl.BlockSpec((C2, K2p), lambda g: (0, 0)),
            pl.BlockSpec((9, N1), lambda g: (0, 0)),
            pl.BlockSpec((9, N2), lambda g: (0, 0)),
            pl.BlockSpec((N1, N2), lambda g: (0, 0)),
            pl.BlockSpec((C1, N1), lambda g: (0, g)),
            pl.BlockSpec((C2, N2), lambda g: (0, g)),
        ],
        out_specs=(
            pl.BlockSpec((C1, N1), lambda g: (0, g)),
            pl.BlockSpec((C2, N2), lambda g: (0, g)),
            pl.BlockSpec((C1, N1), lambda g: (0, g)),
            pl.BlockSpec((C2, N2), lambda g: (0, g)),
        ),
        scratch_shapes=[
            pltpu.VMEM((K1p, N1), jnp.float32),   # conv1 patches
            pltpu.VMEM((K2p, N2), jnp.float32),   # conv2 patches
        ],
        compiler_params=pltpu.CompilerParams(
            dimension_semantics=("parallel",)),
        cost_estimate=cost,
    )(*inputs)

    # back to NCHW (tiny wrapper transposes; kernel-side stores stay lane-dense)
    def to_nchw(a, C, h, w):
        return jnp.transpose(a.reshape(C, B, h, w), (1, 0, 2, 3))

    feats = [to_nchw(y1, C1, H, W),       # Return() #1 -> (B, 16, 16, 16)
             to_nchw(y2, C2, Ho, Wo)]     # Return() #2 -> (B, 32, 8, 8)
    new_state = (to_nchw(v1n, C1, H, W), to_nchw(v2n, C2, Ho, Wo))
    return feats, new_state


# ----------------------------------------------------------------------------
# Pure-JAX reference for verification (NCHW throughout)
# ----------------------------------------------------------------------------
def ref_forward(x_nchw, raw):
    def block(x, w, scale, shift, v):
        z = jax.lax.conv_general_dilated(
            x, w, (1, 1), "SAME", dimension_numbers=("NCHW", "HWIO", "NCHW"))
        z = z * scale.reshape(1, -1, 1, 1) + shift.reshape(1, -1, 1, 1)
        v = BETA * v + z
        s = (v >= THR).astype(jnp.float32)
        return s, v * (1.0 - s)

    B, Cin, H, W = x_nchw.shape
    C1 = raw["w1"].shape[-1]
    C2 = raw["w2"].shape[-1]
    v1 = jnp.zeros((B, C1, H, W), jnp.float32)
    v2 = jnp.zeros((B, C2, H // 2, W // 2), jnp.float32)
    y1, v1n = block(x_nchw, raw["w1"], raw["scale1"], raw["shift1"], v1)
    p1 = jnp.mean(y1.reshape(B, C1, H // 2, 2, W // 2, 2), axis=(3, 5))
    y2, v2n = block(p1, raw["w2"], raw["scale2"], raw["shift2"], v2)
    return [y1, y2], (v1n, v2n)


if __name__ == "__main__":
    key = jax.random.PRNGKey(0)
    B, Cin, H, W = 2, 2, 16, 16
    C1, C2 = 16, 32
    Ho, Wo = H // 2, W // 2

    k_x, k_w1, k_w2 = jax.random.split(key, 3)

    # Input (NCHW, like the torch module). Scaled up so LIF neurons fire.
    x_nchw = 2.0 * jax.random.normal(k_x, (B, Cin, H, W), jnp.float32)

    # Kaiming-normal (fan_out) conv weights, HWIO layout, bias=False.
    def kaiming(k, kh, kw, cin, cout):
        std = np.sqrt(2.0 / (cout * kh * kw))
        return std * jax.random.normal(k, (kh, kw, cin, cout), jnp.float32)

    w1 = kaiming(k_w1, 3, 3, Cin, C1)
    w2 = kaiming(k_w2, 3, 3, C1, C2)

    # BatchNorm (inference mode) folded to scale/shift with default stats.
    # TODO(synk): training-mode BatchNorm (batch statistics) not implemented;
    # inference-mode running stats are used instead.
    bn_scale = 1.0 / np.sqrt(1.0 + BN_EPS)
    raw = {
        "w1": w1,
        "scale1": jnp.full((C1,), bn_scale, jnp.float32),
        "shift1": jnp.zeros((C1,), jnp.float32),
        "w2": w2,
        "scale2": jnp.full((C2,), bn_scale, jnp.float32),
        "shift2": jnp.zeros((C2,), jnp.float32),
    }
    params = fold_params(raw)

    feats, state = neck_forward(x_nchw, params, state=None)
    feats = [jax.block_until_ready(f) for f in feats]
    state = jax.block_until_ready(state)

    # Verify against pure-JAX reference (spike maps and new LIF membrane states).
    ref_feats, ref_state = ref_forward(x_nchw, raw)
    for got, ref in zip(feats, ref_feats):
        assert got.shape == ref.shape
        np.testing.assert_allclose(np.asarray(got), np.asarray(ref),
                                   rtol=1e-4, atol=1e-4)
    for got, ref in zip(state, ref_state):
        assert got.shape == ref.shape
        np.testing.assert_allclose(np.asarray(got), np.asarray(ref),
                                   rtol=1e-4, atol=1e-4)

    print("KERNEL_OK")
</pallas_src>

<mosaic_0001>
module attributes {stable_mosaic.version = 11 : i64} {
  func.func @kernel(%arg0: i32, %arg1: memref<8x512xf32, #tpu.memory_space<vmem>>, %arg2: memref<16x80xf32, #tpu.memory_space<vmem>>, %arg3: memref<32x152xf32, #tpu.memory_space<vmem>>, %arg4: memref<9x512xf32, #tpu.memory_space<vmem>>, %arg5: memref<9x128xf32, #tpu.memory_space<vmem>>, %arg6: memref<512x128xf32, #tpu.memory_space<vmem>>, %arg7: memref<16x512xf32, #tpu.memory_space<vmem>>, %arg8: memref<32x128xf32, #tpu.memory_space<vmem>>, %arg9: memref<16x512xf32, #tpu.memory_space<vmem>>, %arg10: memref<32x128xf32, #tpu.memory_space<vmem>>, %arg11: memref<16x512xf32, #tpu.memory_space<vmem>>, %arg12: memref<32x128xf32, #tpu.memory_space<vmem>>, %arg13: memref<80x512xf32, #tpu.memory_space<vmem>>, %arg14: memref<152x128xf32, #tpu.memory_space<vmem>>) attributes {dimension_semantics = [#tpu.dimension_semantics<parallel>], iteration_bounds = array<i64: 1>, scalar_prefetch = 0 : i64, scratch_operands = 2 : i64, tpu.core_type = #tpu.core_type<tc>, window_params = [{transform_indices = @transform_0, window_bounds = array<i64: 8, 512>}, {pipeline_mode = #tpu.pipeline_mode<synchronous>, transform_indices = @transform_1, window_bounds = array<i64: 16, 80>}, {pipeline_mode = #tpu.pipeline_mode<synchronous>, transform_indices = @transform_2, window_bounds = array<i64: 32, 152>}, {pipeline_mode = #tpu.pipeline_mode<synchronous>, transform_indices = @transform_3, window_bounds = array<i64: 9, 512>}, {pipeline_mode = #tpu.pipeline_mode<synchronous>, transform_indices = @transform_4, window_bounds = array<i64: 9, 128>}, {pipeline_mode = #tpu.pipeline_mode<synchronous>, transform_indices = @transform_5, window_bounds = array<i64: 512, 128>}, {transform_indices = @transform_6, window_bounds = array<i64: 16, 512>}, {transform_indices = @transform_7, window_bounds = array<i64: 32, 128>}, {transform_indices = @transform_8, window_bounds = array<i64: 16, 512>}, {transform_indices = @transform_9, window_bounds = array<i64: 32, 128>}, {transform_indices = @transform_10, window_bounds = array<i64: 16, 512>}, {transform_indices = @transform_11, window_bounds = array<i64: 32, 128>}]} {
    %c0_i32 = arith.constant 0 : i32
    %0 = arith.cmpi eq, %arg0, %c0_i32 : i32
    %1 = arith.extui %0 : i1 to i32
    %c0_i32_0 = arith.constant 0 : i32
    %2 = arith.cmpi ne, %1, %c0_i32_0 : i32
    scf.if %2 {
      %cst_86 = arith.constant 0.000000e+00 : f32
      %124 = vector.broadcast %cst_86 : f32 to vector<8x512xf32>
      %c72 = arith.constant 72 : index
      %c0_87 = arith.constant 0 : index
      %125 = vector.load %arg13[%c72, %c0_87] : memref<80x512xf32, #tpu.memory_space<vmem>>, vector<8x512xf32>
      tpu.vector_store %arg13[%c72, %c0_87], %124 {strides = array<i32>} : memref<80x512xf32, #tpu.memory_space<vmem>>, vector<8x512xf32>,
      %cst_88 = arith.constant 1.000000e+00 : f32
      %126 = vector.broadcast %cst_88 : f32 to vector<1x512xf32>
      %c72_89 = arith.constant 72 : index
      %c0_90 = arith.constant 0 : index
      %127 = vector.load %arg13[%c72_89, %c0_90] : memref<80x512xf32, #tpu.memory_space<vmem>>, vector<1x512xf32>
      tpu.vector_store %arg13[%c72_89, %c0_90], %126 {strides = array<i32>} : memref<80x512xf32, #tpu.memory_space<vmem>>, vector<1x512xf32>,
      %cst_91 = arith.constant 0.000000e+00 : f32
      %128 = vector.broadcast %cst_91 : f32 to vector<8x128xf32>
      %c144 = arith.constant 144 : index
      %c0_92 = arith.constant 0 : index
      %129 = vector.load %arg14[%c144, %c0_92] : memref<152x128xf32, #tpu.memory_space<vmem>>, vector<8x128xf32>
      tpu.vector_store %arg14[%c144, %c0_92], %128 {strides = array<i32>} : memref<152x128xf32, #tpu.memory_space<vmem>>, vector<8x128xf32>,
      %cst_93 = arith.constant 1.000000e+00 : f32
      %130 = vector.broadcast %cst_93 : f32 to vector<1x128xf32>
      %c144_94 = arith.constant 144 : index
      %c0_95 = arith.constant 0 : index
      %131 = vector.load %arg14[%c144_94, %c0_95] : memref<152x128xf32, #tpu.memory_space<vmem>>, vector<1x128xf32>
      tpu.vector_store %arg14[%c144_94, %c0_95], %130 {strides = array<i32>} : memref<152x128xf32, #tpu.memory_space<vmem>>, vector<1x128xf32>,
    } else {
    }
    %c0 = arith.constant 0 : index
    %c0_1 = arith.constant 0 : index
    %3 = vector.load %arg1[%c0, %c0_1] : memref<8x512xf32, #tpu.memory_space<vmem>>, vector<8x512xf32>
    %c17_i32 = arith.constant 17 : i32
    %4 = tpu.dynamic_rotate %3 by %c17_i32 dim 1 : vector<8x512xf32>, i32 -> vector<8x512xf32>
    %c0_2 = arith.constant 0 : index
    %c0_3 = arith.constant 0 : index
    %5 = vector.load %arg4[%c0_2, %c0_3] : memref<9x512xf32, #tpu.memory_space<vmem>>, vector<1x512xf32>
    %6 = vector.broadcast %5 : vector<1x512xf32> to vector<8x512xf32>
    %7 = arith.mulf %4, %6 : vector<8x512xf32>
    %c0_4 = arith.constant 0 : index
    %c0_5 = arith.constant 0 : index
    %8 = vector.load %arg13[%c0_4, %c0_5] : memref<80x512xf32, #tpu.memory_space<vmem>>, vector<8x512xf32>
    tpu.vector_store %arg13[%c0_4, %c0_5], %7 {strides = array<i32>} : memref<80x512xf32, #tpu.memory_space<vmem>>, vector<8x512xf32>,
    %c16_i32 = arith.constant 16 : i32
    %9 = tpu.dynamic_rotate %3 by %c16_i32 dim 1 : vector<8x512xf32>, i32 -> vector<8x512xf32>
    %c1 = arith.constant 1 : index
    %c0_6 = arith.constant 0 : index
    %10 = vector.load %arg4[%c1, %c0_6] : memref<9x512xf32, #tpu.memory_space<vmem>>, vector<1x512xf32>
    %11 = vector.broadcast %10 : vector<1x512xf32> to vector<8x512xf32>
    %12 = arith.mulf %9, %11 : vector<8x512xf32>
    %c8 = arith.constant 8 : index
    %c0_7 = arith.constant 0 : index
    %13 = vector.load %arg13[%c8, %c0_7] : memref<80x512xf32, #tpu.memory_space<vmem>>, vector<8x512xf32>
    tpu.vector_store %arg13[%c8, %c0_7], %12 {strides = array<i32>} : memref<80x512xf32, #tpu.memory_space<vmem>>, vector<8x512xf32>,
    %c15_i32 = arith.constant 15 : i32
    %14 = tpu.dynamic_rotate %3 by %c15_i32 dim 1 : vector<8x512xf32>, i32 -> vector<8x512xf32>
    %c2 = arith.constant 2 : index
    %c0_8 = arith.constant 0 : index
    %15 = vector.load %arg4[%c2, %c0_8] : memref<9x512xf32, #tpu.memory_space<vmem>>, vector<1x512xf32>
    %16 = vector.broadcast %15 : vector<1x512xf32> to vector<8x512xf32>
    %17 = arith.mulf %14, %16 : vector<8x512xf32>
    %c16 = arith.constant 16 : index
    %c0_9 = arith.constant 0 : index
    %18 = vector.load %arg13[%c16, %c0_9] : memref<80x512xf32, #tpu.memory_space<vmem>>, vector<8x512xf32>
    tpu.vector_store %arg13[%c16, %c0_9], %17 {strides = array<i32>} : memref<80x512xf32, #tpu.memory_space<vmem>>, vector<8x512xf32>,
    %c1_i32 = arith.constant 1 : i32
    %19 = tpu.dynamic_rotate %3 by %c1_i32 dim 1 : vector<8x512xf32>, i32 -> vector<8x512xf32>
    %c3 = arith.constant 3 : index
    %c0_10 = arith.constant 0 : index
    %20 = vector.load %arg4[%c3, %c0_10] : memref<9x512xf32, #tpu.memory_space<vmem>>, vector<1x512xf32>
    %21 = vector.broadcast %20 : vector<1x512xf32> to vector<8x512xf32>
    %22 = arith.mulf %19, %21 : vector<8x512xf32>
    %c24 = arith.constant 24 : index
    %c0_11 = arith.constant 0 : index
    %23 = vector.load %arg13[%c24, %c0_11] : memref<80x512xf32, #tpu.memory_space<vmem>>, vector<8x512xf32>
    tpu.vector_store %arg13[%c24, %c0_11], %22 {strides = array<i32>} : memref<80x512xf32, #tpu.memory_space<vmem>>, vector<8x512xf32>,
    %c4 = arith.constant 4 : index
    %c0_12 = arith.constant 0 : index
    %24 = vector.load %arg4[%c4, %c0_12] : memref<9x512xf32, #tpu.memory_space<vmem>>, vector<1x512xf32>
    %25 = vector.broadcast %24 : vector<1x512xf32> to vector<8x512xf32>
    %26 = arith.mulf %3, %25 : vector<8x512xf32>
    %c32 = arith.constant 32 : index
    %c0_13 = arith.constant 0 : index
    %27 = vector.load %arg13[%c32, %c0_13] : memref<80x512xf32, #tpu.memory_space<vmem>>, vector<8x512xf32>
    tpu.vector_store %arg13[%c32, %c0_13], %26 {strides = array<i32>} : memref<80x512xf32, #tpu.memory_space<vmem>>, vector<8x512xf32>,
    %c511_i32 = arith.constant 511 : i32
    %28 = tpu.dynamic_rotate %3 by %c511_i32 dim 1 : vector<8x512xf32>, i32 -> vector<8x512xf32>
    %c5 = arith.constant 5 : index
    %c0_14 = arith.constant 0 : index
    %29 = vector.load %arg4[%c5, %c0_14] : memref<9x512xf32, #tpu.memory_space<vmem>>, vector<1x512xf32>
    %30 = vector.broadcast %29 : vector<1x512xf32> to vector<8x512xf32>
    %31 = arith.mulf %28, %30 : vector<8x512xf32>
    %c40 = arith.constant 40 : index
    %c0_15 = arith.constant 0 : index
    %32 = vector.load %arg13[%c40, %c0_15] : memref<80x512xf32, #tpu.memory_space<vmem>>, vector<8x512xf32>
    tpu.vector_store %arg13[%c40, %c0_15], %31 {strides = array<i32>} : memref<80x512xf32, #tpu.memory_space<vmem>>, vector<8x512xf32>,
    %c497_i32 = arith.constant 497 : i32
    %33 = tpu.dynamic_rotate %3 by %c497_i32 dim 1 : vector<8x512xf32>, i32 -> vector<8x512xf32>
    %c6 = arith.constant 6 : index
    %c0_16 = arith.constant 0 : index
    %34 = vector.load %arg4[%c6, %c0_16] : memref<9x512xf32, #tpu.memory_space<vmem>>, vector<1x512xf32>
    %35 = vector.broadcast %34 : vector<1x512xf32> to vector<8x512xf32>
    %36 = arith.mulf %33, %35 : vector<8x512xf32>
    %c48 = arith.constant 48 : index
    %c0_17 = arith.constant 0 : index
    %37 = vector.load %arg13[%c48, %c0_17] : memref<80x512xf32, #tpu.memory_space<vmem>>, vector<8x512xf32>
    tpu.vector_store %arg13[%c48, %c0_17], %36 {strides = array<i32>} : memref<80x512xf32, #tpu.memory_space<vmem>>, vector<8x512xf32>,
    %c496_i32 = arith.constant 496 : i32
    %38 = tpu.dynamic_rotate %3 by %c496_i32 dim 1 : vector<8x512xf32>, i32 -> vector<8x512xf32>
    %c7 = arith.constant 7 : index
    %c0_18 = arith.constant 0 : index
    %39 = vector.load %arg4[%c7, %c0_18] : memref<9x512xf32, #tpu.memory_space<vmem>>, vector<1x512xf32>
    %40 = vector.broadcast %39 : vector<1x512xf32> to vector<8x512xf32>
    %41 = arith.mulf %38, %40 : vector<8x512xf32>
    %c56 = arith.constant 56 : index
    %c0_19 = arith.constant 0 : index
    %42 = vector.load %arg13[%c56, %c0_19] : memref<80x512xf32, #tpu.memory_space<vmem>>, vector<8x512xf32>
    tpu.vector_store %arg13[%c56, %c0_19], %41 {strides = array<i32>} : memref<80x512xf32, #tpu.memory_space<vmem>>, vector<8x512xf32>,
    %c495_i32 = arith.constant 495 : i32
    %43 = tpu.dynamic_rotate %3 by %c495_i32 dim 1 : vector<8x512xf32>, i32 -> vector<8x512xf32>
    %c8_20 = arith.constant 8 : index
    %c0_21 = arith.constant 0 : index
    %44 = vector.load %arg4[%c8_20, %c0_21] : memref<9x512xf32, #tpu.memory_space<vmem>>, vector<1x512xf32>
    %45 = vector.broadcast %44 : vector<1x512xf32> to vector<8x512xf32>
    %46 = arith.mulf %43, %45 : vector<8x512xf32>
    %c64 = arith.constant 64 : index
    %c0_22 = arith.constant 0 : index
    %47 = vector.load %arg13[%c64, %c0_22] : memref<80x512xf32, #tpu.memory_space<vmem>>, vector<8x512xf32>
    tpu.vector_store %arg13[%c64, %c0_22], %46 {strides = array<i32>} : memref<80x512xf32, #tpu.memory_space<vmem>>, vector<8x512xf32>,
    %c0_23 = arith.constant 0 : index
    %c0_24 = arith.constant 0 : index
    %48 = vector.load %arg2[%c0_23, %c0_24] : memref<16x80xf32, #tpu.memory_space<vmem>>, vector<16x80xf32>
    %c0_25 = arith.constant 0 : index
    %c0_26 = arith.constant 0 : index
    %49 = vector.load %arg13[%c0_25, %c0_26] : memref<80x512xf32, #tpu.memory_space<vmem>>, vector<80x512xf32>
    %cst = arith.constant dense<0.000000e+00> : vector<16x512xf32>
    %50 = tpu.matmul %48, %49, %cst {dimension_numbers = #tpu.dot_dimension_numbers<[1], [0], [0], [1], [0, 0, 1, 1], [], []>} : vector<16x80xf32>, vector<80x512xf32>, vector<16x512xf32> -> vector<16x512xf32>
    %c0_27 = arith.constant 0 : index
    %c0_28 = arith.constant 0 : index
    %51 = vector.load %arg7[%c0_27, %c0_28] : memref<16x512xf32, #tpu.memory_space<vmem>>, vector<16x512xf32>
    %cst_29 = arith.constant 0.899999976 : f32
    %52 = vector.broadcast %cst_29 : f32 to vector<16x512xf32>
    %53 = arith.mulf %52, %51 : vector<16x512xf32>
    %54 = arith.addf %53, %50 : vector<16x512xf32>
    %cst_30 = arith.constant 1.000000e+00 : f32
    %55 = vector.broadcast %cst_30 : f32 to vector<16x512xf32>
    %56 = arith.cmpf oge, %54, %55 : vector<16x512xf32>
    %57 = arith.extui %56 : vector<16x512xi1> to vector<16x512xi32>
    %58 = arith.sitofp %57 : vector<16x512xi32> to vector<16x512xf32>
    %c0_31 = arith.constant 0 : index
    %c0_32 = arith.constant 0 : index
    %59 = vector.load %arg9[%c0_31, %c0_32] : memref<16x512xf32, #tpu.memory_space<vmem>>, vector<16x512xf32>
    tpu.vector_store %arg9[%c0_31, %c0_32], %58 {strides = array<i32>} : memref<16x512xf32, #tpu.memory_space<vmem>>, vector<16x512xf32>,
    %cst_33 = arith.constant 0.000000e+00 : f32
    %60 = vector.broadcast %cst_33 : f32 to vector<16x512xf32>
    %61 = arith.select %56, %60, %54 : vector<16x512xi1>, vector<16x512xf32>
    %c0_34 = arith.constant 0 : index
    %c0_35 = arith.constant 0 : index
    %62 = vector.load %arg11[%c0_34, %c0_35] : memref<16x512xf32, #tpu.memory_space<vmem>>, vector<16x512xf32>
    tpu.vector_store %arg11[%c0_34, %c0_35], %61 {strides = array<i32>} : memref<16x512xf32, #tpu.memory_space<vmem>>, vector<16x512xf32>,
    %c0_36 = arith.constant 0 : index
    %c0_37 = arith.constant 0 : index
    %63 = vector.load %arg6[%c0_36, %c0_37] : memref<512x128xf32, #tpu.memory_space<vmem>>, vector<512x128xf32>
    %cst_38 = arith.constant dense<0.000000e+00> : vector<16x128xf32>
    %64 = tpu.matmul %58, %63, %cst_38 {dimension_numbers = #tpu.dot_dimension_numbers<[1], [0], [0], [1], [0, 0, 1, 1], [], []>} : vector<16x512xf32>, vector<512x128xf32>, vector<16x128xf32> -> vector<16x128xf32>
    %c9_i32 = arith.constant 9 : i32
    %65 = tpu.dynamic_rotate %64 by %c9_i32 dim 1 : vector<16x128xf32>, i32 -> vector<16x128xf32>
    %c0_39 = arith.constant 0 : index
    %c0_40 = arith.constant 0 : index
    %66 = vector.load %arg5[%c0_39, %c0_40] : memref<9x128xf32, #tpu.memory_space<vmem>>, vector<1x128xf32>
    %67 = vector.broadcast %66 : vector<1x128xf32> to vector<16x128xf32>
    %68 = arith.mulf %65, %67 : vector<16x128xf32>
    %c0_41 = arith.constant 0 : index
    %c0_42 = arith.constant 0 : index
    %69 = vector.load %arg14[%c0_41, %c0_42] : memref<152x128xf32, #tpu.memory_space<vmem>>, vector<16x128xf32>
    tpu.vector_store %arg14[%c0_41, %c0_42], %68 {strides = array<i32>} : memref<152x128xf32, #tpu.memory_space<vmem>>, vector<16x128xf32>,
    %c8_i32 = arith.constant 8 : i32
    %70 = tpu.dynamic_rotate %64 by %c8_i32 dim 1 : vector<16x128xf32>, i32 -> vector<16x128xf32>
    %c1_43 = arith.constant 1 : index
    %c0_44 = arith.constant 0 : index
    %71 = vector.load %arg5[%c1_43, %c0_44] : memref<9x128xf32, #tpu.memory_space<vmem>>, vector<1x128xf32>
    %72 = vector.broadcast %71 : vector<1x128xf32> to vector<16x128xf32>
    %73 = arith.mulf %70, %72 : vector<16x128xf32>
    %c16_45 = arith.constant 16 : index
    %c0_46 = arith.constant 0 : index
    %74 = vector.load %arg14[%c16_45, %c0_46] : memref<152x128xf32, #tpu.memory_space<vmem>>, vector<16x128xf32>
    tpu.vector_store %arg14[%c16_45, %c0_46], %73 {strides = array<i32>} : memref<152x128xf32, #tpu.memory_space<vmem>>, vector<16x128xf32>,
    %c7_i32 = arith.constant 7 : i32
    %75 = tpu.dynamic_rotate %64 by %c7_i32 dim 1 : vector<16x128xf32>, i32 -> vector<16x128xf32>
    %c2_47 = arith.constant 2 : index
    %c0_48 = arith.constant 0 : index
    %76 = vector.load %arg5[%c2_47, %c0_48] : memref<9x128xf32, #tpu.memory_space<vmem>>, vector<1x128xf32>
    %77 = vector.broadcast %76 : vector<1x128xf32> to vector<16x128xf32>
    %78 = arith.mulf %75, %77 : vector<16x128xf32>
    %c32_49 = arith.constant 32 : index
    %c0_50 = arith.constant 0 : index
    %79 = vector.load %arg14[%c32_49, %c0_50] : memref<152x128xf32, #tpu.memory_space<vmem>>, vector<16x128xf32>
    tpu.vector_store %arg14[%c32_49, %c0_50], %78 {strides = array<i32>} : memref<152x128xf32, #tpu.memory_space<vmem>>, vector<16x128xf32>,
    %c1_i32_51 = arith.constant 1 : i32
    %80 = tpu.dynamic_rotate %64 by %c1_i32_51 dim 1 : vector<16x128xf32>, i32 -> vector<16x128xf32>
    %c3_52 = arith.constant 3 : index
    %c0_53 = arith.constant 0 : index
    %81 = vector.load %arg5[%c3_52, %c0_53] : memref<9x128xf32, #tpu.memory_space<vmem>>, vector<1x128xf32>
    %82 = vector.broadcast %81 : vector<1x128xf32> to vector<16x128xf32>
    %83 = arith.mulf %80, %82 : vector<16x128xf32>
    %c48_54 = arith.constant 48 : index
    %c0_55 = arith.constant 0 : index
    %84 = vector.load %arg14[%c48_54, %c0_55] : memref<152x128xf32, #tpu.memory_space<vmem>>, vector<16x128xf32>
    tpu.vector_store %arg14[%c48_54, %c0_55], %83 {strides = array<i32>} : memref<152x128xf32, #tpu.memory_space<vmem>>, vector<16x128xf32>,
    %c4_56 = arith.constant 4 : index
    %c0_57 = arith.constant 0 : index
    %85 = vector.load %arg5[%c4_56, %c0_57] : memref<9x128xf32, #tpu.memory_space<vmem>>, vector<1x128xf32>
    %86 = vector.broadcast %85 : vector<1x128xf32> to vector<16x128xf32>
    %87 = arith.mulf %64, %86 : vector<16x128xf32>
    %c64_58 = arith.constant 64 : index
    %c0_59 = arith.constant 0 : index
    %88 = vector.load %arg14[%c64_58, %c0_59] : memref<152x128xf32, #tpu.memory_space<vmem>>, vector<16x128xf32>
    tpu.vector_store %arg14[%c64_58, %c0_59], %87 {strides = array<i32>} : memref<152x128xf32, #tpu.memory_space<vmem>>, vector<16x128xf32>,
    %c127_i32 = arith.constant 127 : i32
    %89 = tpu.dynamic_rotate %64 by %c127_i32 dim 1 : vector<16x128xf32>, i32 -> vector<16x128xf32>
    %c5_60 = arith.constant 5 : index
    %c0_61 = arith.constant 0 : index
    %90 = vector.load %arg5[%c5_60, %c0_61] : memref<9x128xf32, #tpu.memory_space<vmem>>, vector<1x128xf32>
    %91 = vector.broadcast %90 : vector<1x128xf32> to vector<16x128xf32>
    %92 = arith.mulf %89, %91 : vector<16x128xf32>
    %c80 = arith.constant 80 : index
    %c0_62 = arith.constant 0 : index
    %93 = vector.load %arg14[%c80, %c0_62] : memref<152x128xf32, #tpu.memory_space<vmem>>, vector<16x128xf32>
    tpu.vector_store %arg14[%c80, %c0_62], %92 {strides = array<i32>} : memref<152x128xf32, #tpu.memory_space<vmem>>, vector<16x128xf32>,
    %c121_i32 = arith.constant 121 : i32
    %94 = tpu.dynamic_rotate %64 by %c121_i32 dim 1 : vector<16x128xf32>, i32 -> vector<16x128xf32>
    %c6_63 = arith.constant 6 : index
    %c0_64 = arith.constant 0 : index
    %95 = vector.load %arg5[%c6_63, %c0_64] : memref<9x128xf32, #tpu.memory_space<vmem>>, vector<1x128xf32>
    %96 = vector.broadcast %95 : vector<1x128xf32> to vector<16x128xf32>
    %97 = arith.mulf %94, %96 : vector<16x128xf32>
    %c96 = arith.constant 96 : index
    %c0_65 = arith.constant 0 : index
    %98 = vector.load %arg14[%c96, %c0_65] : memref<152x128xf32, #tpu.memory_space<vmem>>, vector<16x128xf32>
    tpu.vector_store %arg14[%c96, %c0_65], %97 {strides = array<i32>} : memref<152x128xf32, #tpu.memory_space<vmem>>, vector<16x128xf32>,
    %c120_i32 = arith.constant 120 : i32
    %99 = tpu.dynamic_rotate %64 by %c120_i32 dim 1 : vector<16x128xf32>, i32 -> vector<16x128xf32>
    %c7_66 = arith.constant 7 : index
    %c0_67 = arith.constant 0 : index
    %100 = vector.load %arg5[%c7_66, %c0_67] : memref<9x128xf32, #tpu.memory_space<vmem>>, vector<1x128xf32>
    %101 = vector.broadcast %100 : vector<1x128xf32> to vector<16x128xf32>
    %102 = arith.mulf %99, %101 : vector<16x128xf32>
    %c112 = arith.constant 112 : index
    %c0_68 = arith.constant 0 : index
    %103 = vector.load %arg14[%c112, %c0_68] : memref<152x128xf32, #tpu.memory_space<vmem>>, vector<16x128xf32>
    tpu.vector_store %arg14[%c112, %c0_68], %102 {strides = array<i32>} : memref<152x128xf32, #tpu.memory_space<vmem>>, vector<16x128xf32>,
    %c119_i32 = arith.constant 119 : i32
    %104 = tpu.dynamic_rotate %64 by %c119_i32 dim 1 : vector<16x128xf32>, i32 -> vector<16x128xf32>
    %c8_69 = arith.constant 8 : index
    %c0_70 = arith.constant 0 : index
    %105 = vector.load %arg5[%c8_69, %c0_70] : memref<9x128xf32, #tpu.memory_space<vmem>>, vector<1x128xf32>
    %106 = vector.broadcast %105 : vector<1x128xf32> to vector<16x128xf32>
    %107 = arith.mulf %104, %106 : vector<16x128xf32>
    %c128 = arith.constant 128 : index
    %c0_71 = arith.constant 0 : index
    %108 = vector.load %arg14[%c128, %c0_71] : memref<152x128xf32, #tpu.memory_space<vmem>>, vector<16x128xf32>
    tpu.vector_store %arg14[%c128, %c0_71], %107 {strides = array<i32>} : memref<152x128xf32, #tpu.memory_space<vmem>>, vector<16x128xf32>,
    %c0_72 = arith.constant 0 : index
    %c0_73 = arith.constant 0 : index
    %109 = vector.load %arg3[%c0_72, %c0_73] : memref<32x152xf32, #tpu.memory_space<vmem>>, vector<32x152xf32>
    %c0_74 = arith.constant 0 : index
    %c0_75 = arith.constant 0 : index
    %110 = vector.load %arg14[%c0_74, %c0_75] : memref<152x128xf32, #tpu.memory_space<vmem>>, vector<152x128xf32>
    %cst_76 = arith.constant dense<0.000000e+00> : vector<32x128xf32>
    %111 = tpu.matmul %109, %110, %cst_76 {dimension_numbers = #tpu.dot_dimension_numbers<[1], [0], [0], [1], [0, 0, 1, 1], [], []>} : vector<32x152xf32>, vector<152x128xf32>, vector<32x128xf32> -> vector<32x128xf32>
    %c0_77 = arith.constant 0 : index
    %c0_78 = arith.constant 0 : index
    %112 = vector.load %arg8[%c0_77, %c0_78] : memref<32x128xf32, #tpu.memory_space<vmem>>, vector<32x128xf32>
    %cst_79 = arith.constant 0.899999976 : f32
    %113 = vector.broadcast %cst_79 : f32 to vector<32x128xf32>
    %114 = arith.mulf %113, %112 : vector<32x128xf32>
    %115 = arith.addf %114, %111 : vector<32x128xf32>
    %cst_80 = arith.constant 1.000000e+00 : f32
    %116 = vector.broadcast %cst_80 : f32 to vector<32x128xf32>
    %117 = arith.cmpf oge, %115, %116 : vector<32x128xf32>
    %118 = arith.extui %117 : vector<32x128xi1> to vector<32x128xi32>
    %119 = arith.sitofp %118 : vector<32x128xi32> to vector<32x128xf32>
    %c0_81 = arith.constant 0 : index
    %c0_82 = arith.constant 0 : index
    %120 = vector.load %arg10[%c0_81, %c0_82] : memref<32x128xf32, #tpu.memory_space<vmem>>, vector<32x128xf32>
    tpu.vector_store %arg10[%c0_81, %c0_82], %119 {strides = array<i32>} : memref<32x128xf32, #tpu.memory_space<vmem>>, vector<32x128xf32>,
    %cst_83 = arith.constant 0.000000e+00 : f32
    %121 = vector.broadcast %cst_83 : f32 to vector<32x128xf32>
    %122 = arith.select %117, %121, %115 : vector<32x128xi1>, vector<32x128xf32>
    %c0_84 = arith.constant 0 : index
    %c0_85 = arith.constant 0 : index
    %123 = vector.load %arg12[%c0_84, %c0_85] : memref<32x128xf32, #tpu.memory_space<vmem>>, vector<32x128xf32>
    tpu.vector_store %arg12[%c0_84, %c0_85], %122 {strides = array<i32>} : memref<32x128xf32, #tpu.memory_space<vmem>>, vector<32x128xf32>,
    return
  }
  func.func @transform_0(%arg0: i32) -> (i32, i32) {
    %c0_i32 = arith.constant 0 : i32
    %c0_i32_0 = arith.constant 0 : i32
    return %c0_i32, %arg0 : i32, i32
  }
  func.func @transform_1(%arg0: i32) -> (i32, i32) {
    %c0_i32 = arith.constant 0 : i32
    %c0_i32_0 = arith.constant 0 : i32
    %c0_i32_1 = arith.constant 0 : i32
    return %c0_i32, %c0_i32_0 : i32, i32
  }
  func.func @transform_2(%arg0: i32) -> (i32, i32) {
    %c0_i32 = arith.constant 0 : i32
    %c0_i32_0 = arith.constant 0 : i32
    %c0_i32_1 = arith.constant 0 : i32
    return %c0_i32, %c0_i32_0 : i32, i32
  }
  func.func @transform_3(%arg0: i32) -> (i32, i32) {
    %c0_i32 = arith.constant 0 : i32
    %c0_i32_0 = arith.constant 0 : i32
    %c0_i32_1 = arith.constant 0 : i32
    return %c0_i32, %c0_i32_0 : i32, i32
  }
  func.func @transform_4(%arg0: i32) -> (i32, i32) {
    %c0_i32 = arith.constant 0 : i32
    %c0_i32_0 = arith.constant 0 : i32
    %c0_i32_1 = arith.constant 0 : i32
    return %c0_i32, %c0_i32_0 : i32, i32
  }
  func.func @transform_5(%arg0: i32) -> (i32, i32) {
    %c0_i32 = arith.constant 0 : i32
    %c0_i32_0 = arith.constant 0 : i32
    %c0_i32_1 = arith.constant 0 : i32
    return %c0_i32, %c0_i32_0 : i32, i32
  }
  func.func @transform_6(%arg0: i32) -> (i32, i32) {
    %c0_i32 = arith.constant 0 : i32
    %c0_i32_0 = arith.constant 0 : i32
    return %c0_i32, %arg0 : i32, i32
  }
  func.func @transform_7(%arg0: i32) -> (i32, i32) {
    %c0_i32 = arith.constant 0 : i32
    %c0_i32_0 = arith.constant 0 : i32
    return %c0_i32, %arg0 : i32, i32
  }
  func.func @transform_8(%arg0: i32) -> (i32, i32) {
    %c0_i32 = arith.constant 0 : i32
    %c0_i32_0 = arith.constant 0 : i32
    return %c0_i32, %arg0 : i32, i32
  }
  func.func @transform_9(%arg0: i32) -> (i32, i32) {
    %c0_i32 = arith.constant 0 : i32
    %c0_i32_0 = arith.constant 0 : i32
    return %c0_i32, %arg0 : i32, i32
  }
  func.func @transform_10(%arg0: i32) -> (i32, i32) {
    %c0_i32 = arith.constant 0 : i32
    %c0_i32_0 = arith.constant 0 : i32
    return %c0_i32, %arg0 : i32, i32
  }
  func.func @transform_11(%arg0: i32) -> (i32, i32) {
    %c0_i32 = arith.constant 0 : i32
    %c0_i32_0 = arith.constant 0 : i32
    return %c0_i32, %arg0 : i32, i32
  }
}

</mosaic_0001>

<llo_original>
// kernel: tpu_custom_call.1
$region0: #{tpu_custom_call.1}
  #allocation0 [shape = 'u32[]', space=smem, size = 0x4, offset = 0x4, fixed_abs, tag = 'smem constant byte address 0x4 - core index']
  #allocation1 [shape = 'u32[72,128]{1,0:T(1,128)}', space=vmem, size = 0x9000, scoped, tag = 'internal scratch']
  #allocation2 [shape = 'f32[80,512]{1,0:T(8,128)}', space=vmem, size = 0x28000, scoped, tag = 'scratch operand']
  #allocation3 [shape = 'f32[152,128]{1,0:T(8,128)}', space=vmem, size = 0x13000, scoped, tag = 'scratch operand']
  %s0 = inlined_call_operand.hbm [shape: f32[8,512], index: 0, kind: input, shape index: {}]
  %s1 = inlined_call_operand.hbm [shape: f32[16,80], index: 1, kind: input, shape index: {}]
  %s2 = inlined_call_operand.hbm [shape: f32[32,152], index: 2, kind: input, shape index: {}]
  %s3 = inlined_call_operand.hbm [shape: f32[9,512], index: 3, kind: input, shape index: {}]
  %s4 = inlined_call_operand.hbm [shape: f32[9,128], index: 4, kind: input, shape index: {}]
  %s5 = inlined_call_operand.hbm [shape: f32[512,128], index: 5, kind: input, shape index: {}]
  %s6 = inlined_call_operand.hbm [shape: f32[16,512], index: 6, kind: input, shape index: {}]
  %s7 = inlined_call_operand.hbm [shape: f32[32,128], index: 7, kind: input, shape index: {}]
  %s8 = inlined_call_operand.hbm [shape: f32[16,512], index: 8, kind: output, shape index: {0}]
  %s9 = inlined_call_operand.hbm [shape: f32[32,128], index: 9, kind: output, shape index: {1}]
  %s10 = inlined_call_operand.hbm [shape: f32[16,512], index: 10, kind: output, shape index: {2}]
  %s11 = inlined_call_operand.hbm [shape: f32[32,128], index: 11, kind: output, shape index: {3}]
  %12 = xla_tuple %s8, %s9, %s10, %s11
  %s13 = sld [smem:[#allocation0]]
  $region102: #{tpu_custom_call.1} parent=0
    _
  %s15 = ssub.s32 1, %s13
  %s16 = scalar_select 0, %s15, %s13
  $region1: #{tpu_custom_call.1} parent=0
    #allocation4 [shape = 'u8[16384]{0}', space=vmem, size = 0x4000, scoped, tag = 'input window, operand 0, single buffered']
    #allocation5 [shape = 's32[1]{0}', space=sflag, size = 0x4, scoped, tag = 'scoped memory for tpu_custom_call.1']
    #allocation6 [shape = 's32[1]{0}', space=sflag, size = 0x4, scoped, tag = 'scoped memory for tpu_custom_call.1']
    #allocation7 [shape = 'u8[8192]{0}', space=vmem, size = 0x2000, scoped, tag = 'input window, operand 1, single buffered']
    #allocation8 [shape = 's32[1]{0}', space=sflag, size = 0x4, scoped, tag = 'scoped memory for tpu_custom_call.1']
    #allocation9 [shape = 'u8[32768]{0}', space=vmem, size = 0x8000, scoped, tag = 'input window, operand 2, single buffered']
    #allocation10 [shape = 'u8[32768]{0}', space=vmem, size = 0x8000, scoped, tag = 'input window, operand 3, single buffered']
    #allocation11 [shape = 's32[1]{0}', space=sflag, size = 0x4, scoped, tag = 'scoped memory for tpu_custom_call.1']
    #allocation12 [shape = 'u8[8192]{0}', space=vmem, size = 0x2000, scoped, tag = 'input window, operand 4, single buffered']
    #allocation13 [shape = 'u8[262144]{0}', space=vmem, size = 0x40000, scoped, tag = 'input window, operand 5, single buffered']
    #allocation14 [shape = 's32[1]{0}', space=sflag, size = 0x4, scoped, tag = 'scoped memory for tpu_custom_call.1']
    #allocation15 [shape = 'u8[32768]{0}', space=vmem, size = 0x8000, scoped, tag = 'input window, operand 6, single buffered']
    #allocation16 [shape = 'u8[16384]{0}', space=vmem, size = 0x4000, scoped, tag = 'input window, operand 7, single buffered']
    #allocation17 [shape = 's32[1]{0}', space=sflag, size = 0x4, scoped, tag = 'scoped memory for tpu_custom_call.1']
    #allocation18 [shape = 'u8[32768]{0}', space=vmem, size = 0x8000, scoped, tag = 'output window, operand 0, single buffered']
    #allocation19 [shape = 'u8[16384]{0}', space=vmem, size = 0x4000, scoped, tag = 'output window, operand 1, single buffered']
    #allocation20 [shape = 's32[1]{0}', space=sflag, size = 0x4, scoped, tag = 'scoped memory for tpu_custom_call.1']
    #allocation21 [shape = 'u8[32768]{0}', space=vmem, size = 0x8000, scoped, tag = 'output window, operand 2, single buffered']
    #allocation22 [shape = 'u8[16384]{0}', space=vmem, size = 0x4000, scoped, tag = 'output window, operand 3, single buffered']
    #allocation23 [shape = 's32[1]{0}', space=sflag, size = 0x4, scoped, tag = 'scoped memory for tpu_custom_call.1']
    %17 = vsyncpa [#allocation5], 0
    %18 = vsyncpa [#allocation8], 0
    %19 = vsyncpa [#allocation11], 0
    %20 = vsyncpa [#allocation14], 0
    %21 = vsyncpa [#allocation17], 0
    %22 = vsyncpa [#allocation6], 0
    %23 = vsyncpa [#allocation20], 0
    %24 = vsyncpa [#allocation23], 0
    // Predicated region
    $region2: #{tpu_custom_call.1} parent=1 // pred_check
      _
    $region3: #{tpu_custom_call.1} parent=1 // pred_check_branch
      %26 = sbr.rel (0) target = $region5
    $region4: #{tpu_custom_call.1} parent=1 // pred_region
      %28 = vsyncadd [#allocation5], 0
      %s30 = sshll.u32 %s0, 4
      %s31 = int_to_ptr.hbm [resolvable:$true] %s30
      %s32 = sshll.u32 [#allocation4], 4
      %s33 = int_to_ptr.vmem [resolvable:$true] %s32
      %35 = dma.hbm_to_vmem [thread:$0]  %s31, 512, %s33, [#allocation5]
    $region5: #{tpu_custom_call.1} parent=1 // pred_fallthru
      _
    // Predicated region
    $region6: #{tpu_custom_call.1} parent=1 // pred_check
      _
    $region7: #{tpu_custom_call.1} parent=1 // pred_check_branch
      %37 = sbr.rel (0) target = $region9
    $region8: #{tpu_custom_call.1} parent=1 // pred_region
      %39 = vsyncadd [#allocation8], 0
      %s40 = sshll.u32 %s1, 4
      %s41 = int_to_ptr.hbm [resolvable:$true] %s40
      %s42 = sshll.u32 [#allocation7], 4
      %s43 = int_to_ptr.vmem [resolvable:$true] %s42
      %48 = dma.hbm_to_vmem [thread:$0]  %s41, 256, %s43, [#allocation8], 128, 128, 8
    $region9: #{tpu_custom_call.1} parent=1 // pred_fallthru
      _
    // Predicated region
    $region10: #{tpu_custom_call.1} parent=1 // pred_check
      _
    $region11: #{tpu_custom_call.1} parent=1 // pred_check_branch
      %50 = sbr.rel (0) target = $region13
    $region12: #{tpu_custom_call.1} parent=1 // pred_region
      %52 = vsyncadd [#allocation8], 0
      %s53 = sshll.u32 %s2, 4
      %s54 = int_to_ptr.hbm [resolvable:$true] %s53
      %s55 = sshll.u32 [#allocation9], 4
      %s56 = int_to_ptr.vmem [resolvable:$true] %s55
      %61 = dma.hbm_to_vmem [thread:$0]  %s54, 1024, %s56, [#allocation8], 256, 256, 16
    $region13: #{tpu_custom_call.1} parent=1 // pred_fallthru
      _
    // Predicated region
    $region14: #{tpu_custom_call.1} parent=1 // pred_check
      _
    $region15: #{tpu_custom_call.1} parent=1 // pred_check_branch
      %63 = sbr.rel (0) target = $region17
    $region16: #{tpu_custom_call.1} parent=1 // pred_region
      %65 = vsyncadd [#allocation11], 0
      %s66 = sshll.u32 %s3, 4
      %s67 = int_to_ptr.hbm [resolvable:$true] %s66
      %s68 = sshll.u32 [#allocation10], 4
      %s69 = int_to_ptr.vmem [resolvable:$true] %s68
      %74 = dma.hbm_to_vmem [thread:$0]  %s67, 1024, %s69, [#allocation11], 512, 512, 32
    $region17: #{tpu_custom_call.1} parent=1 // pred_fallthru
      _
    // Predicated region
    $region18: #{tpu_custom_call.1} parent=1 // pred_check
      _
    $region19: #{tpu_custom_call.1} parent=1 // pred_check_branch
      %76 = sbr.rel (0) target = $region21
    $region20: #{tpu_custom_call.1} parent=1 // pred_region
      %78 = vsyncadd [#allocation11], 0
      %s79 = sshll.u32 %s4, 4
      %s80 = int_to_ptr.hbm [resolvable:$true] %s79
      %s81 = sshll.u32 [#allocation12], 4
      %s82 = int_to_ptr.vmem [resolvable:$true] %s81
      %87 = dma.hbm_to_vmem [thread:$0]  %s80, 256, %s82, [#allocation11], 128, 128, 8
    $region21: #{tpu_custom_call.1} parent=1 // pred_fallthru
      _
    // Predicated region
    $region22: #{tpu_custom_call.1} parent=1 // pred_check
      _
    $region23: #{tpu_custom_call.1} parent=1 // pred_check_branch
      %89 = sbr.rel (0) target = $region25
    $region24: #{tpu_custom_call.1} parent=1 // pred_region
      %91 = vsyncadd [#allocation14], 0
      %s92 = sshll.u32 %s5, 4
      %s93 = int_to_ptr.hbm [resolvable:$true] %s92
      %s94 = sshll.u32 [#allocation13], 4
      %s95 = int_to_ptr.vmem [resolvable:$true] %s94
      %100 = dma.hbm_to_vmem [thread:$0]  %s93, 8192, %s95, [#allocation14], 128, 128, 8
    $region25: #{tpu_custom_call.1} parent=1 // pred_fallthru
      _
    // Predicated region
    $region26: #{tpu_custom_call.1} parent=1 // pred_check
      _
    $region27: #{tpu_custom_call.1} parent=1 // pred_check_branch
      %102 = sbr.rel (0) target = $region29
    $region28: #{tpu_custom_call.1} parent=1 // pred_region
      %104 = vsyncadd [#allocation14], 0
      %s105 = sshll.u32 %s6, 4
      %s106 = int_to_ptr.hbm [resolvable:$true] %s105
      %s107 = sshll.u32 [#allocation15], 4
      %s108 = int_to_ptr.vmem [resolvable:$true] %s107
      %113 = dma.hbm_to_vmem [thread:$0]  %s106, 1024, %s108, [#allocation14], 512, 512, 32
    $region29: #{tpu_custom_call.1} parent=1 // pred_fallthru
      _
    // Predicated region
    $region30: #{tpu_custom_call.1} parent=1 // pred_check
      _
    $region31: #{tpu_custom_call.1} parent=1 // pred_check_branch
      %115 = sbr.rel (0) target = $region33
    $region32: #{tpu_custom_call.1} parent=1 // pred_region
      %117 = vsyncadd [#allocation17], 0
      %s118 = sshll.u32 %s7, 4
      %s119 = int_to_ptr.hbm [resolvable:$true] %s118
      %s120 = sshll.u32 [#allocation16], 4
      %s121 = int_to_ptr.vmem [resolvable:$true] %s120
      %126 = dma.hbm_to_vmem [thread:$0]  %s119, 512, %s121, [#allocation17], 128, 128, 8
    $region33: #{tpu_custom_call.1} parent=1 // pred_fallthru
      _
    // Predicated region
    $region34: #{tpu_custom_call.1} parent=1 // pred_check
      _
    $region35: #{tpu_custom_call.1} parent=1 // pred_check_branch
      %128 = sbr.rel (0) target = $region37
    $region36: #{tpu_custom_call.1} parent=1 // pred_region
      %130 = dma.done [#allocation5], 512
    $region37: #{tpu_custom_call.1} parent=1 // pred_fallthru
      _
    // Predicated region
    $region38: #{tpu_custom_call.1} parent=1 // pred_check
      _
    $region39: #{tpu_custom_call.1} parent=1 // pred_check_branch
      %132 = sbr.rel (0) target = $region41
    $region40: #{tpu_custom_call.1} parent=1 // pred_region
      %134 = dma.done [#allocation8], 256
    $region41: #{tpu_custom_call.1} parent=1 // pred_fallthru
      _
    // Predicated region
    $region42: #{tpu_custom_call.1} parent=1 // pred_check
      _
    $region43: #{tpu_custom_call.1} parent=1 // pred_check_branch
      %136 = sbr.rel (0) target = $region45
    $region44: #{tpu_custom_call.1} parent=1 // pred_region
      %138 = dma.done [#allocation8], 1024
    $region45: #{tpu_custom_call.1} parent=1 // pred_fallthru
      _
    // Predicated region
    $region46: #{tpu_custom_call.1} parent=1 // pred_check
      _
    $region47: #{tpu_custom_call.1} parent=1 // pred_check_branch
      %140 = sbr.rel (0) target = $region49
    $region48: #{tpu_custom_call.1} parent=1 // pred_region
      %142 = dma.done [#allocation11], 1024
    $region49: #{tpu_custom_call.1} parent=1 // pred_fallthru
      _
    // Predicated region
    $region50: #{tpu_custom_call.1} parent=1 // pred_check
      _
    $region51: #{tpu_custom_call.1} parent=1 // pred_check_branch
      %144 = sbr.rel (0) target = $region53
    $region52: #{tpu_custom_call.1} parent=1 // pred_region
      %146 = dma.done [#allocation11], 256
    $region53: #{tpu_custom_call.1} parent=1 // pred_fallthru
      _
    // Predicated region
    $region54: #{tpu_custom_call.1} parent=1 // pred_check
      _
    $region55: #{tpu_custom_call.1} parent=1 // pred_check_branch
      %148 = sbr.rel (0) target = $region57
    $region56: #{tpu_custom_call.1} parent=1 // pred_region
      %150 = dma.done [#allocation14], 8192
    $region57: #{tpu_custom_call.1} parent=1 // pred_fallthru
      _
    // Predicated region
    $region58: #{tpu_custom_call.1} parent=1 // pred_check
      _
    $region59: #{tpu_custom_call.1} parent=1 // pred_check_branch
      %152 = sbr.rel (0) target = $region61
    $region60: #{tpu_custom_call.1} parent=1 // pred_region
      %154 = dma.done [#allocation14], 1024
    $region61: #{tpu_custom_call.1} parent=1 // pred_fallthru
      _
    // Predicated region
    $region62: #{tpu_custom_call.1} parent=1 // pred_check
      _
    $region63: #{tpu_custom_call.1} parent=1 // pred_check_branch
      %156 = sbr.rel (0) target = $region65
    $region64: #{tpu_custom_call.1} parent=1 // pred_region
      %158 = dma.done [#allocation17], 512
    $region65: #{tpu_custom_call.1} parent=1 // pred_fallthru
      _
    %p159 = scmp.eq.s32.totalorder 0, 0
    // Predicated region
    $region66: #{tpu_custom_call.1} parent=1 // pred_check
      %p160 = pneg %p159
    $region67: #{tpu_custom_call.1} parent=1 // pred_check_branch
      %162 = sbr.rel (%p160) target = $region69
    $region68: #{tpu_custom_call.1} parent=1 // pred_region
      %163 = vst [vmem:[#allocation2 + $0x120] sm:$0xff] 0.0
      %164 = vst [vmem:[#allocation2 + $0x128] sm:$0xff] 0.0
      %165 = vst [vmem:[#allocation2 + $0x130] sm:$0xff] 0.0
      %166 = vst [vmem:[#allocation2 + $0x138] sm:$0xff] 0.0
      %v167 = vlaneseq
      %vm168 = vcmp.ge.s32.totalorder %v167, 0
      %vm169 = vcmp.lt.s32.totalorder %v167, 512
      %vm170 = vmand %vm168, %vm169
      %s171 = scalar_lea.vmem [#allocation2], 288
      %172 = vst.msk [vmem:[%s171] ss:$8 sm:$0xf] %vm170, 1.0
      %173 = vst.msk [vmem:[%s171] ss:$8 sm:$0x0] %vm170, 1.0
      %174 = vst [vmem:[#allocation3 + $0x90] sm:$0xff] 0.0
      %175 = vst [vmem:[#allocation3 + $0x90] sm:$0x1] 1.0
    $region69: #{tpu_custom_call.1} parent=1 // pred_fallthru
      _
    %v176 = vld [vmem:[#allocation4] sm:$0xff]
    %v177 = vld [vmem:[#allocation4 + $0x8] sm:$0xff]
    %v178 = vld [vmem:[#allocation4 + $0x10] sm:$0xff]
    %v179 = vld [vmem:[#allocation4 + $0x18] sm:$0xff]
    %180 = vrot.lane.b32.xlu0 %v176, 17
    %v181 = vpop.permute.xlu0 %180
    %182 = vrot.lane.b32.xlu0 %v177, 17
    %v183 = vpop.permute.xlu0 %182
    %184 = vrot.lane.b32.xlu0 %v178, 17
    %v185 = vpop.permute.xlu0 %184
    %186 = vrot.lane.b32.xlu0 %v179, 17
    %v187 = vpop.permute.xlu0 %186
    %v188 = vlaneseq
    %v189 = vand.u32 %v188, 127
    %vm190 = vcmp.lt.s32.totalorder %v189, 17
    %v191 = vsel %vm190, %v185, %v187
    %v192 = vsel %vm190, %v183, %v185
    %v193 = vsel %vm190, %v181, %v183
    %v194 = vsel %vm190, %v187, %v181
    %v195 = vld [vmem:[#allocation10] ss:$8 sm:$0xf]
    %v197 = vperm.slane %v195, 0
    %v198 = vperm.slane %v195, 1
    %v199 = vperm.slane %v195, 2
    %v200 = vperm.slane %v195, 3
    %v205 = vmul.f32 %v194, %v197
    %v206 = vmul.f32 %v193, %v198
    %v207 = vmul.f32 %v192, %v199
    %v208 = vmul.f32 %v191, %v200
    %209 = vst [vmem:[#allocation2] sm:$0xff] %v205
    %210 = vst [vmem:[#allocation2 + $0x8] sm:$0xff] %v206
    %211 = vst [vmem:[#allocation2 + $0x10] sm:$0xff] %v207
    %212 = vst [vmem:[#allocation2 + $0x18] sm:$0xff] %v208
    %213 = vrot.lane.b32.xlu0 %v176, 16
    %v214 = vpop.permute.xlu0 %213
    %215 = vrot.lane.b32.xlu0 %v177, 16
    %v216 = vpop.permute.xlu0 %215
    %217 = vrot.lane.b32.xlu0 %v178, 16
    %v218 = vpop.permute.xlu0 %217
    %219 = vrot.lane.b32.xlu0 %v179, 16
    %v220 = vpop.permute.xlu0 %219
    %vm221 = vcmp.lt.s32.totalorder %v189, 16
    %v222 = vsel %vm221, %v218, %v220
    %v223 = vsel %vm221, %v216, %v218
    %v224 = vsel %vm221, %v214, %v216
    %v225 = vsel %vm221, %v220, %v214
    %s226 = scalar_lea.vmem [#allocation10], 1
    %v227 = vld [vmem:[%s226] ss:$8 sm:$0xf]
    %v229 = vperm.slane %v227, 0
    %v230 = vperm.slane %v227, 1
    %v231 = vperm.slane %v227, 2
    %v232 = vperm.slane %v227, 3
    %v237 = vmul.f32 %v225, %v229
    %v238 = vmul.f32 %v224, %v230
    %v239 = vmul.f32 %v223, %v231
    %v240 = vmul.f32 %v222, %v232
    %241 = vst [vmem:[#allocation2 + $0x20] sm:$0xff] %v237
    %242 = vst [vmem:[#allocation2 + $0x28] sm:$0xff] %v238
    %243 = vst [vmem:[#allocation2 + $0x30] sm:$0xff] %v239
    %244 = vst [vmem:[#allocation2 + $0x38] sm:$0xff] %v240
    %245 = vrot.lane.b32.xlu0 %v176, 15
    %v246 = vpop.permute.xlu0 %245
    %247 = vrot.lane.b32.xlu0 %v177, 15
    %v248 = vpop.permute.xlu0 %247
    %249 = vrot.lane.b32.xlu0 %v178, 15
    %v250 = vpop.permute.xlu0 %249
    %251 = vrot.lane.b32.xlu0 %v179, 15
    %v252 = vpop.permute.xlu0 %251
    %vm253 = vcmp.lt.s32.totalorder %v189, 15
    %v254 = vsel %vm253, %v250, %v252
    %v255 = vsel %vm253, %v248, %v250
    %v256 = vsel %vm253, %v246, %v248
    %v257 = vsel %vm253, %v252, %v246
    %s258 = scalar_lea.vmem [#allocation10], 2
    %v259 = vld [vmem:[%s258] ss:$8 sm:$0xf]
    %v261 = vperm.slane %v259, 0
    %v262 = vperm.slane %v259, 1
    %v263 = vperm.slane %v259, 2
    %v264 = vperm.slane %v259, 3
    %v269 = vmul.f32 %v257, %v261
    %v270 = vmul.f32 %v256, %v262
    %v271 = vmul.f32 %v255, %v263
    %v272 = vmul.f32 %v254, %v264
    %273 = vst [vmem:[#allocation2 + $0x40] sm:$0xff] %v269
    %274 = vst [vmem:[#allocation2 + $0x48] sm:$0xff] %v270
    %275 = vst [vmem:[#allocation2 + $0x50] sm:$0xff] %v271
    %276 = vst [vmem:[#allocation2 + $0x58] sm:$0xff] %v272
    %277 = vrot.lane.b32.xlu0 %v176, 1
    %v278 = vpop.permute.xlu0 %277
    %279 = vrot.lane.b32.xlu0 %v177, 1
    %v280 = vpop.permute.xlu0 %279
    %281 = vrot.lane.b32.xlu0 %v178, 1
    %v282 = vpop.permute.xlu0 %281
    %283 = vrot.lane.b32.xlu0 %v179, 1
    %v284 = vpop.permute.xlu0 %283
    %vm285 = vcmp.lt.s32.totalorder %v189, 1
    %v286 = vsel %vm285, %v282, %v284
    %v287 = vsel %vm285, %v280, %v282
    %v288 = vsel %vm285, %v278, %v280
    %v289 = vsel %vm285, %v284, %v278
    %s290 = scalar_lea.vmem [#allocation10], 3
    %v291 = vld [vmem:[%s290] ss:$8 sm:$0xf]
    %v293 = vperm.slane %v291, 0
    %v294 = vperm.slane %v291, 1
    %v295 = vperm.slane %v291, 2
    %v296 = vperm.slane %v291, 3
    %v301 = vmul.f32 %v289, %v293
    %v302 = vmul.f32 %v288, %v294
    %v303 = vmul.f32 %v287, %v295
    %v304 = vmul.f32 %v286, %v296
    %305 = vst [vmem:[#allocation2 + $0x60] sm:$0xff] %v301
    %306 = vst [vmem:[#allocation2 + $0x68] sm:$0xff] %v302
    %307 = vst [vmem:[#allocation2 + $0x70] sm:$0xff] %v303
    %308 = vst [vmem:[#allocation2 + $0x78] sm:$0xff] %v304
    %s309 = scalar_lea.vmem [#allocation10], 4
    %v310 = vld [vmem:[%s309] ss:$8 sm:$0xf]
    %v312 = vperm.slane %v310, 0
    %v313 = vperm.slane %v310, 1
    %v314 = vperm.slane %v310, 2
    %v315 = vperm.slane %v310, 3
    %v320 = vmul.f32 %v176, %v312
    %v321 = vmul.f32 %v177, %v313
    %v322 = vmul.f32 %v178, %v314
    %v323 = vmul.f32 %v179, %v315
    %324 = vst [vmem:[#allocation2 + $0x80] sm:$0xff] %v320
    %325 = vst [vmem:[#allocation2 + $0x88] sm:$0xff] %v321
    %326 = vst [vmem:[#allocation2 + $0x90] sm:$0xff] %v322
    %327 = vst [vmem:[#allocation2 + $0x98] sm:$0xff] %v323
    %328 = vrot.lane.b32.xlu0 %v176, 127
    %v329 = vpop.permute.xlu0 %328
    %330 = vrot.lane.b32.xlu0 %v177, 127
    %v331 = vpop.permute.xlu0 %330
    %332 = vrot.lane.b32.xlu0 %v178, 127
    %v333 = vpop.permute.xlu0 %332
    %334 = vrot.lane.b32.xlu0 %v179, 127
    %v335 = vpop.permute.xlu0 %334
    %vm336 = vcmp.lt.s32.totalorder %v189, 127
    %v337 = vsel %vm336, %v333, %v335
    %v338 = vsel %vm336, %v331, %v333
    %v339 = vsel %vm336, %v329, %v331
    %v340 = vsel %vm336, %v335, %v329
    %s341 = scalar_lea.vmem [#allocation10], 5
    %v342 = vld [vmem:[%s341] ss:$8 sm:$0xf]
    %v344 = vperm.slane %v342, 0
    %v345 = vperm.slane %v342, 1
    %v346 = vperm.slane %v342, 2
    %v347 = vperm.slane %v342, 3
    %v352 = vmul.f32 %v339, %v344
    %v353 = vmul.f32 %v338, %v345
    %v354 = vmul.f32 %v337, %v346
    %v355 = vmul.f32 %v340, %v347
    %356 = vst [vmem:[#allocation2 + $0xa0] sm:$0xff] %v352
    %357 = vst [vmem:[#allocation2 + $0xa8] sm:$0xff] %v353
    %358 = vst [vmem:[#allocation2 + $0xb0] sm:$0xff] %v354
    %359 = vst [vmem:[#allocation2 + $0xb8] sm:$0xff] %v355
    %360 = vrot.lane.b32.xlu0 %v176, 113
    %v361 = vpop.permute.xlu0 %360
    %362 = vrot.lane.b32.xlu0 %v177, 113
    %v363 = vpop.permute.xlu0 %362
    %364 = vrot.lane.b32.xlu0 %v178, 113
    %v365 = vpop.permute.xlu0 %364
    %366 = vrot.lane.b32.xlu0 %v179, 113
    %v367 = vpop.permute.xlu0 %366
    %vm368 = vcmp.lt.s32.totalorder %v189, 113
    %v369 = vsel %vm368, %v365, %v367
    %v370 = vsel %vm368, %v363, %v365
    %v371 = vsel %vm368, %v361, %v363
    %v372 = vsel %vm368, %v367, %v361
    %s373 = scalar_lea.vmem [#allocation10], 6
    %v374 = vld [vmem:[%s373] ss:$8 sm:$0xf]
    %v376 = vperm.slane %v374, 0
    %v377 = vperm.slane %v374, 1
    %v378 = vperm.slane %v374, 2
    %v379 = vperm.slane %v374, 3
    %v384 = vmul.f32 %v371, %v376
    %v385 = vmul.f32 %v370, %v377
    %v386 = vmul.f32 %v369, %v378
    %v387 = vmul.f32 %v372, %v379
    %388 = vst [vmem:[#allocation2 + $0xc0] sm:$0xff] %v384
    %389 = vst [vmem:[#allocation2 + $0xc8] sm:$0xff] %v385
    %390 = vst [vmem:[#allocation2 + $0xd0] sm:$0xff] %v386
    %391 = vst [vmem:[#allocation2 + $0xd8] sm:$0xff] %v387
    %392 = vrot.lane.b32.xlu0 %v176, 112
    %v393 = vpop.permute.xlu0 %392
    %394 = vrot.lane.b32.xlu0 %v177, 112
    %v395 = vpop.permute.xlu0 %394
    %396 = vrot.lane.b32.xlu0 %v178, 112
    %v397 = vpop.permute.xlu0 %396
    %398 = vrot.lane.b32.xlu0 %v179, 112
    %v399 = vpop.permute.xlu0 %398
    %vm400 = vcmp.lt.s32.totalorder %v189, 112
    %v401 = vsel %vm400, %v397, %v399
    %v402 = vsel %vm400, %v395, %v397
    %v403 = vsel %vm400, %v393, %v395
    %v404 = vsel %vm400, %v399, %v393
    %s405 = scalar_lea.vmem [#allocation10], 7
    %v406 = vld [vmem:[%s405] ss:$8 sm:$0xf]
    %v408 = vperm.slane %v406, 0
    %v409 = vperm.slane %v406, 1
    %v410 = vperm.slane %v406, 2
    %v411 = vperm.slane %v406, 3
    %v416 = vmul.f32 %v403, %v408
    %v417 = vmul.f32 %v402, %v409
    %v418 = vmul.f32 %v401, %v410
    %v419 = vmul.f32 %v404, %v411
    %420 = vst [vmem:[#allocation2 + $0xe0] sm:$0xff] %v416
    %421 = vst [vmem:[#allocation2 + $0xe8] sm:$0xff] %v417
    %422 = vst [vmem:[#allocation2 + $0xf0] sm:$0xff] %v418
    %423 = vst [vmem:[#allocation2 + $0xf8] sm:$0xff] %v419
    %424 = vrot.lane.b32.xlu0 %v176, 111
    %v425 = vpop.permute.xlu0 %424
    %426 = vrot.lane.b32.xlu0 %v177, 111
    %v427 = vpop.permute.xlu0 %426
    %428 = vrot.lane.b32.xlu0 %v178, 111
    %v429 = vpop.permute.xlu0 %428
    %430 = vrot.lane.b32.xlu0 %v179, 111
    %v431 = vpop.permute.xlu0 %430
    %vm432 = vcmp.lt.s32.totalorder %v189, 111
    %v433 = vsel %vm432, %v429, %v431
    %v434 = vsel %vm432, %v427, %v429
    %v435 = vsel %vm432, %v425, %v427
    %v436 = vsel %vm432, %v431, %v425
    %s437 = scalar_lea.vmem [#allocation10], 32
    %v438 = vld [vmem:[%s437] ss:$8 sm:$0xf]
    %v440 = vperm.slane %v438, 0
    %v441 = vperm.slane %v438, 1
    %v442 = vperm.slane %v438, 2
    %v443 = vperm.slane %v438, 3
    %v448 = vmul.f32 %v435, %v440
    %v449 = vmul.f32 %v434, %v441
    %v450 = vmul.f32 %v433, %v442
    %v451 = vmul.f32 %v436, %v443
    %452 = vst [vmem:[#allocation2 + $0x100] sm:$0xff] %v448
    %453 = vst [vmem:[#allocation2 + $0x108] sm:$0xff] %v449
    %454 = vst [vmem:[#allocation2 + $0x110] sm:$0xff] %v450
    %455 = vst [vmem:[#allocation2 + $0x118] sm:$0xff] %v451
    %v456 = vld [vmem:[#allocation7] sm:$0xff]
    %v457 = vld [vmem:[#allocation7 + $0x8] sm:$0xff]
    %v458 = vld [vmem:[#allocation2] sm:$0xff]
    %v459 = vld [vmem:[#allocation2 + $0x8] sm:$0xff]
    %v460 = vld [vmem:[#allocation2 + $0x10] sm:$0xff]
    %v461 = vld [vmem:[#allocation2 + $0x18] sm:$0xff]
    %v462 = vld [vmem:[#allocation2 + $0x20] sm:$0xff]
    %v463 = vld [vmem:[#allocation2 + $0x28] sm:$0xff]
    %v464 = vld [vmem:[#allocation2 + $0x30] sm:$0xff]
    %v465 = vld [vmem:[#allocation2 + $0x38] sm:$0xff]
    %v466 = vld [vmem:[#allocation2 + $0x40] sm:$0xff]
    %v467 = vld [vmem:[#allocation2 + $0x48] sm:$0xff]
    %v468 = vld [vmem:[#allocation2 + $0x50] sm:$0xff]
    %v469 = vld [vmem:[#allocation2 + $0x58] sm:$0xff]
    %v470 = vld [vmem:[#allocation2 + $0x60] sm:$0xff]
    %v471 = vld [vmem:[#allocation2 + $0x68] sm:$0xff]
    %v472 = vld [vmem:[#allocation2 + $0x70] sm:$0xff]
    %v473 = vld [vmem:[#allocation2 + $0x78] sm:$0xff]
    %v474 = vld [vmem:[#allocation2 + $0x80] sm:$0xff]
    %v475 = vld [vmem:[#allocation2 + $0x88] sm:$0xff]
    %v476 = vld [vmem:[#allocation2 + $0x90] sm:$0xff]
    %v477 = vld [vmem:[#allocation2 + $0x98] sm:$0xff]
    %v478 = vld [vmem:[#allocation2 + $0xa0] sm:$0xff]
    %v479 = vld [vmem:[#allocation2 + $0xa8] sm:$0xff]
    %v480 = vld [vmem:[#allocation2 + $0xb0] sm:$0xff]
    %v481 = vld [vmem:[#allocation2 + $0xb8] sm:$0xff]
    %v482 = vld [vmem:[#allocation2 + $0xc0] sm:$0xff]
    %v483 = vld [vmem:[#allocation2 + $0xc8] sm:$0xff]
    %v484 = vld [vmem:[#allocation2 + $0xd0] sm:$0xff]
    %v485 = vld [vmem:[#allocation2 + $0xd8] sm:$0xff]
    %v486 = vld [vmem:[#allocation2 + $0xe0] sm:$0xff]
    %v487 = vld [vmem:[#allocation2 + $0xe8] sm:$0xff]
    %v488 = vld [vmem:[#allocation2 + $0xf0] sm:$0xff]
    %v489 = vld [vmem:[#allocation2 + $0xf8] sm:$0xff]
    %v490 = vld [vmem:[#allocation2 + $0x100] sm:$0xff]
    %v491 = vld [vmem:[#allocation2 + $0x108] sm:$0xff]
    %v492 = vld [vmem:[#allocation2 + $0x110] sm:$0xff]
    %v493 = vld [vmem:[#allocation2 + $0x118] sm:$0xff]
    %v494 = vld [vmem:[#allocation2 + $0x120] sm:$0xff]
    %v495 = vld [vmem:[#allocation2 + $0x128] sm:$0xff]
    %v496 = vld [vmem:[#allocation2 + $0x130] sm:$0xff]
    %v497 = vld [vmem:[#allocation2 + $0x138] sm:$0xff]
    %vm498 = vcmask 654336
    %v500 = vsel %vm498, %v456, 0
    %v503 = vsel %vm498, %v457, 0
    %505 = vmatpush.msra.mxu0 0.0
    %506 = vmatpush.msra.mxu0 0.0
    %507 = vmatpush.msra.mxu0 0.0
    %508 = vmatpush.msra.mxu0 0.0
    %509 = vmatpush.msra.mxu0 0.0
    %510 = vmatpush.msra.mxu0 0.0
    %511 = vmatpush.msra.mxu0 %v494
    %512 = vmatpush.msra.mxu0 %v490
    %513 = vmatpush.msra.mxu0 %v486
    %514 = vmatpush.msra.mxu0 %v482
    %515 = vmatpush.msra.mxu0 %v478
    %516 = vmatpush.msra.mxu0 %v474
    %517 = vmatpush.msra.mxu0 %v470
    %518 = vmatpush.msra.mxu0 %v466
    %519 = vmatpush.msra.mxu0 %v462
    %520 = vmatpush.msra.mxu0 %v458
    %521 = vmatmul.f32.gmra.mxu0 %v500
    %v522 = vpop.f32.mrf.mxu0
    %v523 = vadd.f32 0.0, %v522
    %524 = vmatmul.f32.gmra.mxu0 %v503
    %v525 = vpop.f32.mrf.mxu0
    %v526 = vadd.f32 0.0, %v525
    %527 = vdwg.mxu0
    %528 = vmatpush.msra.mxu0 0.0
    %529 = vmatpush.msra.mxu0 0.0
    %530 = vmatpush.msra.mxu0 0.0
    %531 = vmatpush.msra.mxu0 0.0
    %532 = vmatpush.msra.mxu0 0.0
    %533 = vmatpush.msra.mxu0 0.0
    %534 = vmatpush.msra.mxu0 %v495
    %535 = vmatpush.msra.mxu0 %v491
    %536 = vmatpush.msra.mxu0 %v487
    %537 = vmatpush.msra.mxu0 %v483
    %538 = vmatpush.msra.mxu0 %v479
    %539 = vmatpush.msra.mxu0 %v475
    %540 = vmatpush.msra.mxu0 %v471
    %541 = vmatpush.msra.mxu0 %v467
    %542 = vmatpush.msra.mxu0 %v463
    %543 = vmatpush.msra.mxu0 %v459
    %544 = vmatmul.f32.gmra.mxu0 %v500
    %v545 = vpop.f32.mrf.mxu0
    %v546 = vadd.f32 0.0, %v545
    %547 = vmatmul.f32.gmra.mxu0 %v503
    %v548 = vpop.f32.mrf.mxu0
    %v549 = vadd.f32 0.0, %v548
    %550 = vdwg.mxu0
    %551 = vmatpush.msra.mxu0 0.0
    %552 = vmatpush.msra.mxu0 0.0
    %553 = vmatpush.msra.mxu0 0.0
    %554 = vmatpush.msra.mxu0 0.0
    %555 = vmatpush.msra.mxu0 0.0
    %556 = vmatpush.msra.mxu0 0.0
    %557 = vmatpush.msra.mxu0 %v496
    %558 = vmatpush.msra.mxu0 %v492
    %559 = vmatpush.msra.mxu0 %v488
    %560 = vmatpush.msra.mxu0 %v484
    %561 = vmatpush.msra.mxu0 %v480
    %562 = vmatpush.msra.mxu0 %v476
    %563 = vmatpush.msra.mxu0 %v472
    %564 = vmatpush.msra.mxu0 %v468
    %565 = vmatpush.msra.mxu0 %v464
    %566 = vmatpush.msra.mxu0 %v460
    %567 = vmatmul.f32.gmra.mxu0 %v500
    %v568 = vpop.f32.mrf.mxu0
    %v569 = vadd.f32 0.0, %v568
    %570 = vmatmul.f32.gmra.mxu0 %v503
    %v571 = vpop.f32.mrf.mxu0
    %v572 = vadd.f32 0.0, %v571
    %573 = vdwg.mxu0
    %574 = vmatpush.msra.mxu0 0.0
    %575 = vmatpush.msra.mxu0 0.0
    %576 = vmatpush.msra.mxu0 0.0
    %577 = vmatpush.msra.mxu0 0.0
    %578 = vmatpush.msra.mxu0 0.0
    %579 = vmatpush.msra.mxu0 0.0
    %580 = vmatpush.msra.mxu0 %v497
    %581 = vmatpush.msra.mxu0 %v493
    %582 = vmatpush.msra.mxu0 %v489
    %583 = vmatpush.msra.mxu0 %v485
    %584 = vmatpush.msra.mxu0 %v481
    %585 = vmatpush.msra.mxu0 %v477
    %586 = vmatpush.msra.mxu0 %v473
    %587 = vmatpush.msra.mxu0 %v469
    %588 = vmatpush.msra.mxu0 %v465
    %589 = vmatpush.msra.mxu0 %v461
    %590 = vmatmul.f32.gmra.mxu0 %v500
    %v591 = vpop.f32.mrf.mxu0
    %v592 = vadd.f32 0.0, %v591
    %593 = vmatmul.f32.gmra.mxu0 %v503
    %v594 = vpop.f32.mrf.mxu0
    %v595 = vadd.f32 0.0, %v594
    %596 = vdwg.mxu0
    %v597 = vld [vmem:[#allocation15] sm:$0xff]
    %v598 = vld [vmem:[#allocation15 + $0x8] sm:$0xff]
    %v599 = vld [vmem:[#allocation15 + $0x10] sm:$0xff]
    %v600 = vld [vmem:[#allocation15 + $0x18] sm:$0xff]
    %v601 = vld [vmem:[#allocation15 + $0x20] sm:$0xff]
    %v602 = vld [vmem:[#allocation15 + $0x28] sm:$0xff]
    %v603 = vld [vmem:[#allocation15 + $0x30] sm:$0xff]
    %v604 = vld [vmem:[#allocation15 + $0x38] sm:$0xff]
    %v605 = vmul.f32 %v597, 0.9
    %v606 = vmul.f32 %v598, 0.9
    %v607 = vmul.f32 %v599, 0.9
    %v608 = vmul.f32 %v600, 0.9
    %v609 = vmul.f32 %v601, 0.9
    %v610 = vmul.f32 %v602, 0.9
    %v611 = vmul.f32 %v603, 0.9
    %v612 = vmul.f32 %v604, 0.9
    %v613 = vadd.f32 %v605, %v523
    %v614 = vadd.f32 %v606, %v546
    %v615 = vadd.f32 %v607, %v569
    %v616 = vadd.f32 %v608, %v592
    %v617 = vadd.f32 %v609, %v526
    %v618 = vadd.f32 %v610, %v549
    %v619 = vadd.f32 %v611, %v572
    %v620 = vadd.f32 %v612, %v595
    %vm621 = vcmp.ge.f32.partialorder %v613, 1.0
    %vm622 = vcmp.ge.f32.partialorder %v614, 1.0
    %vm623 = vcmp.ge.f32.partialorder %v615, 1.0
    %vm624 = vcmp.ge.f32.partialorder %v616, 1.0
    %vm625 = vcmp.ge.f32.partialorder %v617, 1.0
    %vm626 = vcmp.ge.f32.partialorder %v618, 1.0
    %vm627 = vcmp.ge.f32.partialorder %v619, 1.0
    %vm628 = vcmp.ge.f32.partialorder %v620, 1.0
    %v629 = vsel %vm621, 1, 0
    %v630 = vsel %vm622, 1, 0
    %v631 = vsel %vm623, 1, 0
    %v632 = vsel %vm624, 1, 0
    %v633 = vsel %vm625, 1, 0
    %v634 = vsel %vm626, 1, 0
    %v635 = vsel %vm627, 1, 0
    %v636 = vsel %vm628, 1, 0
    %v637 = vcvt.s32.f32 %v629
    %v638 = vcvt.s32.f32 %v630
    %v639 = vcvt.s32.f32 %v631
    %v640 = vcvt.s32.f32 %v632
    %v641 = vcvt.s32.f32 %v633
    %v642 = vcvt.s32.f32 %v634
    %v643 = vcvt.s32.f32 %v635
    %v644 = vcvt.s32.f32 %v636
    %645 = vst [vmem:[#allocation18] sm:$0xff] %v637
    %646 = vst [vmem:[#allocation18 + $0x8] sm:$0xff] %v638
    %647 = vst [vmem:[#allocation18 + $0x10] sm:$0xff] %v639
    %648 = vst [vmem:[#allocation18 + $0x18] sm:$0xff] %v640
    %649 = vst [vmem:[#allocation18 + $0x20] sm:$0xff] %v641
    %650 = vst [vmem:[#allocation18 + $0x28] sm:$0xff] %v642
    %651 = vst [vmem:[#allocation18 + $0x30] sm:$0xff] %v643
    %652 = vst [vmem:[#allocation18 + $0x38] sm:$0xff] %v644
    %v653 = vsel %vm621, 0.0, %v613
    %v654 = vsel %vm622, 0.0, %v614
    %v655 = vsel %vm623, 0.0, %v615
    %v656 = vsel %vm624, 0.0, %v616
    %v657 = vsel %vm625, 0.0, %v617
    %v658 = vsel %vm626, 0.0, %v618
    %v659 = vsel %vm627, 0.0, %v619
    %v660 = vsel %vm628, 0.0, %v620
    %661 = vst [vmem:[#allocation21] sm:$0xff] %v653
    %662 = vst [vmem:[#allocation21 + $0x8] sm:$0xff] %v654
    %663 = vst [vmem:[#allocation21 + $0x10] sm:$0xff] %v655
    %664 = vst [vmem:[#allocation21 + $0x18] sm:$0xff] %v656
    %665 = vst [vmem:[#allocation21 + $0x20] sm:$0xff] %v657
    %666 = vst [vmem:[#allocation21 + $0x28] sm:$0xff] %v658
    %667 = vst [vmem:[#allocation21 + $0x30] sm:$0xff] %v659
    %668 = vst [vmem:[#allocation21 + $0x38] sm:$0xff] %v660
    %v669 = vld [vmem:[#allocation13] sm:$0xff]
    %v670 = vld [vmem:[#allocation13 + $0x8] sm:$0xff]
    %v671 = vld [vmem:[#allocation13 + $0x10] sm:$0xff]
    %v672 = vld [vmem:[#allocation13 + $0x18] sm:$0xff]
    %v673 = vld [vmem:[#allocation13 + $0x20] sm:$0xff]
    %v674 = vld [vmem:[#allocation13 + $0x28] sm:$0xff]
    %v675 = vld [vmem:[#allocation13 + $0x30] sm:$0xff]
    %v676 = vld [vmem:[#allocation13 + $0x38] sm:$0xff]
    %v677 = vld [vmem:[#allocation13 + $0x40] sm:$0xff]
    %v678 = vld [vmem:[#allocation13 + $0x48] sm:$0xff]
    %v679 = vld [vmem:[#allocation13 + $0x50] sm:$0xff]
    %v680 = vld [vmem:[#allocation13 + $0x58] sm:$0xff]
    %v681 = vld [vmem:[#allocation13 + $0x60] sm:$0xff]
    %v682 = vld [vmem:[#allocation13 + $0x68] sm:$0xff]
    %v683 = vld [vmem:[#allocation13 + $0x70] sm:$0xff]
    %v684 = vld [vmem:[#allocation13 + $0x78] sm:$0xff]
    %v685 = vld [vmem:[#allocation13 + $0x80] sm:$0xff]
    %v686 = vld [vmem:[#allocation13 + $0x88] sm:$0xff]
    %v687 = vld [vmem:[#allocation13 + $0x90] sm:$0xff]
    %v688 = vld [vmem:[#allocation13 + $0x98] sm:$0xff]
    %v689 = vld [vmem:[#allocation13 + $0xa0] sm:$0xff]
    %v690 = vld [vmem:[#allocation13 + $0xa8] sm:$0xff]
    %v691 = vld [vmem:[#allocation13 + $0xb0] sm:$0xff]
    %v692 = vld [vmem:[#allocation13 + $0xb8] sm:$0xff]
    %v693 = vld [vmem:[#allocation13 + $0xc0] sm:$0xff]
    %v694 = vld [vmem:[#allocation13 + $0xc8] sm:$0xff]
    %v695 = vld [vmem:[#allocation13 + $0xd0] sm:$0xff]
    %v696 = vld [vmem:[#allocation13 + $0xd8] sm:$0xff]
    %v697 = vld [vmem:[#allocation13 + $0xe0] sm:$0xff]
    %v698 = vld [vmem:[#allocation13 + $0xe8] sm:$0xff]
    %v699 = vld [vmem:[#allocation13 + $0xf0] sm:$0xff]
    %v700 = vld [vmem:[#allocation13 + $0xf8] sm:$0xff]
    %v701 = vld [vmem:[#allocation13 + $0x100] sm:$0xff]
    %v702 = vld [vmem:[#allocation13 + $0x108] sm:$0xff]
    %v703 = vld [vmem:[#allocation13 + $0x110] sm:$0xff]
    %v704 = vld [vmem:[#allocation13 + $0x118] sm:$0xff]
    %v705 = vld [vmem:[#allocation13 + $0x120] sm:$0xff]
    %v706 = vld [vmem:[#allocation13 + $0x128] sm:$0xff]
    %v707 = vld [vmem:[#allocation13 + $0x130] sm:$0xff]
    %v708 = vld [vmem:[#allocation13 + $0x138] sm:$0xff]
    %v709 = vld [vmem:[#allocation13 + $0x140] sm:$0xff]
    %v710 = vld [vmem:[#allocation13 + $0x148] sm:$0xff]
    %v711 = vld [vmem:[#allocation13 + $0x150] sm:$0xff]
    %v712 = vld [vmem:[#allocation13 + $0x158] sm:$0xff]
    %v713 = vld [vmem:[#allocation13 + $0x160] sm:$0xff]
    %v714 = vld [vmem:[#allocation13 + $0x168] sm:$0xff]
    %v715 = vld [vmem:[#allocation13 + $0x170] sm:$0xff]
    %v716 = vld [vmem:[#allocation13 + $0x178] sm:$0xff]
    %v717 = vld [vmem:[#allocation13 + $0x180] sm:$0xff]
    %v718 = vld [vmem:[#allocation13 + $0x188] sm:$0xff]
    %v719 = vld [vmem:[#allocation13 + $0x190] sm:$0xff]
    %v720 = vld [vmem:[#allocation13 + $0x198] sm:$0xff]
    %v721 = vld [vmem:[#allocation13 + $0x1a0] sm:$0xff]
    %v722 = vld [vmem:[#allocation13 + $0x1a8] sm:$0xff]
    %v723 = vld [vmem:[#allocation13 + $0x1b0] sm:$0xff]
    %v724 = vld [vmem:[#allocation13 + $0x1b8] sm:$0xff]
    %v725 = vld [vmem:[#allocation13 + $0x1c0] sm:$0xff]
    %v726 = vld [vmem:[#allocation13 + $0x1c8] sm:$0xff]
    %v727 = vld [vmem:[#allocation13 + $0x1d0] sm:$0xff]
    %v728 = vld [vmem:[#allocation13 + $0x1d8] sm:$0xff]
    %v729 = vld [vmem:[#allocation13 + $0x1e0] sm:$0xff]
    %v730 = vld [vmem:[#allocation13 + $0x1e8] sm:$0xff]
    %v731 = vld [vmem:[#allocation13 + $0x1f0] sm:$0xff]
    %v732 = vld [vmem:[#allocation13 + $0x1f8] sm:$0xff]
    %733 = vmatpush.msra.mxu0 %v684
    %734 = vmatpush.msra.mxu0 %v683
    %735 = vmatpush.msra.mxu0 %v682
    %736 = vmatpush.msra.mxu0 %v681
    %737 = vmatpush.msra.mxu0 %v680
    %738 = vmatpush.msra.mxu0 %v679
    %739 = vmatpush.msra.mxu0 %v678
    %740 = vmatpush.msra.mxu0 %v677
    %741 = vmatpush.msra.mxu0 %v676
    %742 = vmatpush.msra.mxu0 %v675
    %743 = vmatpush.msra.mxu0 %v674
    %744 = vmatpush.msra.mxu0 %v673
    %745 = vmatpush.msra.mxu0 %v672
    %746 = vmatpush.msra.mxu0 %v671
    %747 = vmatpush.msra.mxu0 %v670
    %748 = vmatpush.msra.mxu0 %v669
    %749 = vmatmul.f32.gmra.mxu0 %v637
    %v750 = vpop.f32.mrf.mxu0
    %v751 = vadd.f32 0.0, %v750
    %752 = vmatmul.f32.gmra.mxu0 %v641
    %v753 = vpop.f32.mrf.mxu0
    %v754 = vadd.f32 0.0, %v753
    %755 = vdwg.mxu0
    %756 = vmatpush.msra.mxu0 %v700
    %757 = vmatpush.msra.mxu0 %v699
    %758 = vmatpush.msra.mxu0 %v698
    %759 = vmatpush.msra.mxu0 %v697
    %760 = vmatpush.msra.mxu0 %v696
    %761 = vmatpush.msra.mxu0 %v695
    %762 = vmatpush.msra.mxu0 %v694
    %763 = vmatpush.msra.mxu0 %v693
    %764 = vmatpush.msra.mxu0 %v692
    %765 = vmatpush.msra.mxu0 %v691
    %766 = vmatpush.msra.mxu0 %v690
    %767 = vmatpush.msra.mxu0 %v689
    %768 = vmatpush.msra.mxu0 %v688
    %769 = vmatpush.msra.mxu0 %v687
    %770 = vmatpush.msra.mxu0 %v686
    %771 = vmatpush.msra.mxu0 %v685
    %772 = vmatmul.f32.gmra.mxu0 %v638
    %v773 = vpop.f32.mrf.mxu0
    %v774 = vadd.f32 %v751, %v773
    %775 = vmatmul.f32.gmra.mxu0 %v642
    %v776 = vpop.f32.mrf.mxu0
    %v777 = vadd.f32 %v754, %v776
    %778 = vdwg.mxu0
    %779 = vmatpush.msra.mxu0 %v716
    %780 = vmatpush.msra.mxu0 %v715
    %781 = vmatpush.msra.mxu0 %v714
    %782 = vmatpush.msra.mxu0 %v713
    %783 = vmatpush.msra.mxu0 %v712
    %784 = vmatpush.msra.mxu0 %v711
    %785 = vmatpush.msra.mxu0 %v710
    %786 = vmatpush.msra.mxu0 %v709
    %787 = vmatpush.msra.mxu0 %v708
    %788 = vmatpush.msra.mxu0 %v707
    %789 = vmatpush.msra.mxu0 %v706
    %790 = vmatpush.msra.mxu0 %v705
    %791 = vmatpush.msra.mxu0 %v704
    %792 = vmatpush.msra.mxu0 %v703
    %793 = vmatpush.msra.mxu0 %v702
    %794 = vmatpush.msra.mxu0 %v701
    %795 = vmatmul.f32.gmra.mxu0 %v639
    %v796 = vpop.f32.mrf.mxu0
    %v797 = vadd.f32 %v774, %v796
    %798 = vmatmul.f32.gmra.mxu0 %v643
    %v799 = vpop.f32.mrf.mxu0
    %v800 = vadd.f32 %v777, %v799
    %801 = vdwg.mxu0
    %802 = vmatpush.msra.mxu0 %v732
    %803 = vmatpush.msra.mxu0 %v731
    %804 = vmatpush.msra.mxu0 %v730
    %805 = vmatpush.msra.mxu0 %v729
    %806 = vmatpush.msra.mxu0 %v728
    %807 = vmatpush.msra.mxu0 %v727
    %808 = vmatpush.msra.mxu0 %v726
    %809 = vmatpush.msra.mxu0 %v725
    %810 = vmatpush.msra.mxu0 %v724
    %811 = vmatpush.msra.mxu0 %v723
    %812 = vmatpush.msra.mxu0 %v722
    %813 = vmatpush.msra.mxu0 %v721
    %814 = vmatpush.msra.mxu0 %v720
    %815 = vmatpush.msra.mxu0 %v719
    %816 = vmatpush.msra.mxu0 %v718
    %817 = vmatpush.msra.mxu0 %v717
    %818 = vmatmul.f32.gmra.mxu0 %v640
    %v819 = vpop.f32.mrf.mxu0
    %v820 = vadd.f32 %v797, %v819
    %821 = vmatmul.f32.gmra.mxu0 %v644
    %v822 = vpop.f32.mrf.mxu0
    %v823 = vadd.f32 %v800, %v822
    %824 = vdwg.mxu0
    %825 = vrot.lane.b32.xlu0 %v820, 9
    %v826 = vpop.permute.xlu0 %825
    %827 = vrot.lane.b32.xlu0 %v823, 9
    %v828 = vpop.permute.xlu0 %827
    %v829 = vld [vmem:[#allocation12] sm:$0x1]
    %v830 = vperm.slane %v829, 0
    %v831 = vmul.f32 %v826, %v830
    %v832 = vmul.f32 %v828, %v830
    %833 = vst [vmem:[#allocation3] sm:$0xff] %v831
    %834 = vst [vmem:[#allocation3 + $0x8] sm:$0xff] %v832
    %835 = vrot.lane.b32.xlu0 %v820, 8
    %v836 = vpop.permute.xlu0 %835
    %837 = vrot.lane.b32.xlu0 %v823, 8
    %v838 = vpop.permute.xlu0 %837
    %v839 = vld [vmem:[#allocation12 + $0x1] sm:$0x1]
    %v840 = vperm.slane %v839, 0
    %v841 = vmul.f32 %v836, %v840
    %v842 = vmul.f32 %v838, %v840
    %843 = vst [vmem:[#allocation3 + $0x10] sm:$0xff] %v841
    %844 = vst [vmem:[#allocation3 + $0x18] sm:$0xff] %v842
    %845 = vrot.lane.b32.xlu0 %v820, 7
    %v846 = vpop.permute.xlu0 %845
    %847 = vrot.lane.b32.xlu0 %v823, 7
    %v848 = vpop.permute.xlu0 %847
    %v849 = vld [vmem:[#allocation12 + $0x2] sm:$0x1]
    %v850 = vperm.slane %v849, 0
    %v851 = vmul.f32 %v846, %v850
    %v852 = vmul.f32 %v848, %v850
    %853 = vst [vmem:[#allocation3 + $0x20] sm:$0xff] %v851
    %854 = vst [vmem:[#allocation3 + $0x28] sm:$0xff] %v852
    %855 = vrot.lane.b32.xlu0 %v820, 1
    %v856 = vpop.permute.xlu0 %855
    %857 = vrot.lane.b32.xlu0 %v823, 1
    %v858 = vpop.permute.xlu0 %857
    %v859 = vld [vmem:[#allocation12 + $0x3] sm:$0x1]
    %v860 = vperm.slane %v859, 0
    %v861 = vmul.f32 %v856, %v860
    %v862 = vmul.f32 %v858, %v860
    %863 = vst [vmem:[#allocation3 + $0x30] sm:$0xff] %v861
    %864 = vst [vmem:[#allocation3 + $0x38] sm:$0xff] %v862
    %v865 = vld [vmem:[#allocation12 + $0x4] sm:$0x1]
    %v866 = vperm.slane %v865, 0
    %v867 = vmul.f32 %v820, %v866
    %v868 = vmul.f32 %v823, %v866
    %869 = vst [vmem:[#allocation3 + $0x40] sm:$0xff] %v867
    %870 = vst [vmem:[#allocation3 + $0x48] sm:$0xff] %v868
    %871 = vrot.lane.b32.xlu0 %v820, 127
    %v872 = vpop.permute.xlu0 %871
    %873 = vrot.lane.b32.xlu0 %v823, 127
    %v874 = vpop.permute.xlu0 %873
    %v875 = vld [vmem:[#allocation12 + $0x5] sm:$0x1]
    %v876 = vperm.slane %v875, 0
    %v877 = vmul.f32 %v872, %v876
    %v878 = vmul.f32 %v874, %v876
    %879 = vst [vmem:[#allocation3 + $0x50] sm:$0xff] %v877
    %880 = vst [vmem:[#allocation3 + $0x58] sm:$0xff] %v878
    %881 = vrot.lane.b32.xlu0 %v820, 121
    %v882 = vpop.permute.xlu0 %881
    %883 = vrot.lane.b32.xlu0 %v823, 121
    %v884 = vpop.permute.xlu0 %883
    %v885 = vld [vmem:[#allocation12 + $0x6] sm:$0x1]
    %v886 = vperm.slane %v885, 0
    %v887 = vmul.f32 %v882, %v886
    %v888 = vmul.f32 %v884, %v886
    %889 = vst [vmem:[#allocation3 + $0x60] sm:$0xff] %v887
    %890 = vst [vmem:[#allocation3 + $0x68] sm:$0xff] %v888
    %891 = vrot.lane.b32.xlu0 %v820, 120
    %v892 = vpop.permute.xlu0 %891
    %893 = vrot.lane.b32.xlu0 %v823, 120
    %v894 = vpop.permute.xlu0 %893
    %v895 = vld [vmem:[#allocation12 + $0x7] sm:$0x1]
    %v896 = vperm.slane %v895, 0
    %v897 = vmul.f32 %v892, %v896
    %v898 = vmul.f32 %v894, %v896
    %899 = vst [vmem:[#allocation3 + $0x70] sm:$0xff] %v897
    %900 = vst [vmem:[#allocation3 + $0x78] sm:$0xff] %v898
    %901 = vrot.lane.b32.xlu0 %v820, 119
    %v902 = vpop.permute.xlu0 %901
    %903 = vrot.lane.b32.xlu0 %v823, 119
    %v904 = vpop.permute.xlu0 %903
    %v905 = vld [vmem:[#allocation12 + $0x8] sm:$0x1]
    %v906 = vperm.slane %v905, 0
    %v907 = vmul.f32 %v902, %v906
    %v908 = vmul.f32 %v904, %v906
    %909 = vst [vmem:[#allocation3 + $0x80] sm:$0xff] %v907
    %910 = vst [vmem:[#allocation3 + $0x88] sm:$0xff] %v908
    %v911 = vld [vmem:[#allocation9] sm:$0xff]
    %v912 = vld [vmem:[#allocation9 + $0x8] sm:$0xff]
    %v913 = vld [vmem:[#allocation9 + $0x10] sm:$0xff]
    %v914 = vld [vmem:[#allocation9 + $0x18] sm:$0xff]
    %v915 = vld [vmem:[#allocation9 + $0x20] sm:$0xff]
    %v916 = vld [vmem:[#allocation9 + $0x28] sm:$0xff]
    %v917 = vld [vmem:[#allocation9 + $0x30] sm:$0xff]
    %v918 = vld [vmem:[#allocation9 + $0x38] sm:$0xff]
    %v919 = vld [vmem:[#allocation3] sm:$0xff]
    %v920 = vld [vmem:[#allocation3 + $0x8] sm:$0xff]
    %v921 = vld [vmem:[#allocation3 + $0x10] sm:$0xff]
    %v922 = vld [vmem:[#allocation3 + $0x18] sm:$0xff]
    %v923 = vld [vmem:[#allocation3 + $0x20] sm:$0xff]
    %v924 = vld [vmem:[#allocation3 + $0x28] sm:$0xff]
    %v925 = vld [vmem:[#allocation3 + $0x30] sm:$0xff]
    %v926 = vld [vmem:[#allocation3 + $0x38] sm:$0xff]
    %v927 = vld [vmem:[#allocation3 + $0x40] sm:$0xff]
    %v928 = vld [vmem:[#allocation3 + $0x48] sm:$0xff]
    %v929 = vld [vmem:[#allocation3 + $0x50] sm:$0xff]
    %v930 = vld [vmem:[#allocation3 + $0x58] sm:$0xff]
    %v931 = vld [vmem:[#allocation3 + $0x60] sm:$0xff]
    %v932 = vld [vmem:[#allocation3 + $0x68] sm:$0xff]
    %v933 = vld [vmem:[#allocation3 + $0x70] sm:$0xff]
    %v934 = vld [vmem:[#allocation3 + $0x78] sm:$0xff]
    %v935 = vld [vmem:[#allocation3 + $0x80] sm:$0xff]
    %v936 = vld [vmem:[#allocation3 + $0x88] sm:$0xff]
    %v937 = vld [vmem:[#allocation3 + $0x90] sm:$0xff]
    %vm938 = vcmask 195584
    %v940 = vsel %vm938, %v912, 0
    %v943 = vsel %vm938, %v914, 0
    %v946 = vsel %vm938, %v916, 0
    %v949 = vsel %vm938, %v918, 0
    %951 = vmatpush.msra.mxu0 %v934
    %952 = vmatpush.msra.mxu0 %v933
    %953 = vmatpush.msra.mxu0 %v932
    %954 = vmatpush.msra.mxu0 %v931
    %955 = vmatpush.msra.mxu0 %v930
    %956 = vmatpush.msra.mxu0 %v929
    %957 = vmatpush.msra.mxu0 %v928
    %958 = vmatpush.msra.mxu0 %v927
    %959 = vmatpush.msra.mxu0 %v926
    %960 = vmatpush.msra.mxu0 %v925
    %961 = vmatpush.msra.mxu0 %v924
    %962 = vmatpush.msra.mxu0 %v923
    %963 = vmatpush.msra.mxu0 %v922
    %964 = vmatpush.msra.mxu0 %v921
    %965 = vmatpush.msra.mxu0 %v920
    %966 = vmatpush.msra.mxu0 %v919
    %967 = vmatmul.f32.gmra.mxu0 %v911
    %v968 = vpop.f32.mrf.mxu0
    %v969 = vadd.f32 0.0, %v968
    %970 = vmatmul.f32.gmra.mxu0 %v913
    %v971 = vpop.f32.mrf.mxu0
    %v972 = vadd.f32 0.0, %v971
    %973 = vmatmul.f32.gmra.mxu0 %v915
    %v974 = vpop.f32.mrf.mxu0
    %v975 = vadd.f32 0.0, %v974
    %976 = vmatmul.f32.gmra.mxu0 %v917
    %v977 = vpop.f32.mrf.mxu0
    %v978 = vadd.f32 0.0, %v977
    %979 = vdwg.mxu0
    %980 = vmatpush.msra.mxu0 0.0
    %981 = vmatpush.msra.mxu0 0.0
    %982 = vmatpush.msra.mxu0 0.0
    %983 = vmatpush.msra.mxu0 0.0
    %984 = vmatpush.msra.mxu0 0.0
    %985 = vmatpush.msra.mxu0 0.0
    %986 = vmatpush.msra.mxu0 0.0
    %987 = vmatpush.msra.mxu0 0.0
    %988 = vmatpush.msra.mxu0 0.0
    %989 = vmatpush.msra.mxu0 0.0
    %990 = vmatpush.msra.mxu0 0.0
    %991 = vmatpush.msra.mxu0 0.0
    %992 = vmatpush.msra.mxu0 0.0
    %993 = vmatpush.msra.mxu0 %v937
    %994 = vmatpush.msra.mxu0 %v936
    %995 = vmatpush.msra.mxu0 %v935
    %996 = vmatmul.f32.gmra.mxu0 %v940
    %v997 = vpop.f32.mrf.mxu0
    %v998 = vadd.f32 %v969, %v997
    %999 = vmatmul.f32.gmra.mxu0 %v943
    %v1000 = vpop.f32.mrf.mxu0
    %v1001 = vadd.f32 %v972, %v1000
    %1002 = vmatmul.f32.gmra.mxu0 %v946
    %v1003 = vpop.f32.mrf.mxu0
    %v1004 = vadd.f32 %v975, %v1003
    %1005 = vmatmul.f32.gmra.mxu0 %v949
    %v1006 = vpop.f32.mrf.mxu0
    %v1007 = vadd.f32 %v978, %v1006
    %1008 = vdwg.mxu0
    %v1009 = vld [vmem:[#allocation16] sm:$0xff]
    %v1010 = vld [vmem:[#allocation16 + $0x8] sm:$0xff]
    %v1011 = vld [vmem:[#allocation16 + $0x10] sm:$0xff]
    %v1012 = vld [vmem:[#allocation16 + $0x18] sm:$0xff]
    %v1013 = vmul.f32 %v1009, 0.9
    %v1014 = vmul.f32 %v1010, 0.9
    %v1015 = vmul.f32 %v1011, 0.9
    %v1016 = vmul.f32 %v1012, 0.9
    %v1017 = vadd.f32 %v1013, %v998
    %v1018 = vadd.f32 %v1014, %v1001
    %v1019 = vadd.f32 %v1015, %v1004
    %v1020 = vadd.f32 %v1016, %v1007
    %vm1021 = vcmp.ge.f32.partialorder %v1017, 1.0
    %vm1022 = vcmp.ge.f32.partialorder %v1018, 1.0
    %vm1023 = vcmp.ge.f32.partialorder %v1019, 1.0
    %vm1024 = vcmp.ge.f32.partialorder %v1020, 1.0
    %v1025 = vsel %vm1021, 1, 0
    %v1026 = vsel %vm1022, 1, 0
    %v1027 = vsel %vm1023, 1, 0
    %v1028 = vsel %vm1024, 1, 0
    %v1029 = vcvt.s32.f32 %v1025
    %v1030 = vcvt.s32.f32 %v1026
    %v1031 = vcvt.s32.f32 %v1027
    %v1032 = vcvt.s32.f32 %v1028
    %1033 = vst [vmem:[#allocation19] sm:$0xff] %v1029
    %1034 = vst [vmem:[#allocation19 + $0x8] sm:$0xff] %v1030
    %1035 = vst [vmem:[#allocation19 + $0x10] sm:$0xff] %v1031
    %1036 = vst [vmem:[#allocation19 + $0x18] sm:$0xff] %v1032
    %v1037 = vsel %vm1021, 0.0, %v1017
    %v1038 = vsel %vm1022, 0.0, %v1018
    %v1039 = vsel %vm1023, 0.0, %v1019
    %v1040 = vsel %vm1024, 0.0, %v1020
    %1041 = vst [vmem:[#allocation22] sm:$0xff] %v1037
    %1042 = vst [vmem:[#allocation22 + $0x8] sm:$0xff] %v1038
    %1043 = vst [vmem:[#allocation22 + $0x10] sm:$0xff] %v1039
    %1044 = vst [vmem:[#allocation22 + $0x18] sm:$0xff] %v1040
    // Predicated region
    $region70: #{tpu_custom_call.1} parent=1 // pred_check
      _
    $region71: #{tpu_custom_call.1} parent=1 // pred_check_branch
      %1046 = sbr.rel (0) target = $region73
    $region72: #{tpu_custom_call.1} parent=1 // pred_region
      %1048 = vsyncadd [#allocation6], 0
      %s1049 = sshll.u32 [#allocation18], 4
      %s1050 = int_to_ptr.vmem [resolvable:$true] %s1049
      %s1051 = sshll.u32 %s8, 4
      %s1052 = int_to_ptr.hbm [resolvable:$true] %s1051
      %1057 = dma.vmem_to_hbm [thread:$0]  %s1050, 1024, %s1052, [#allocation6], 512, 512, 32
    $region73: #{tpu_custom_call.1} parent=1 // pred_fallthru
      _
    // Predicated region
    $region74: #{tpu_custom_call.1} parent=1 // pred_check
      _
    $region75: #{tpu_custom_call.1} parent=1 // pred_check_branch
      %1059 = sbr.rel (0) target = $region77
    $region76: #{tpu_custom_call.1} parent=1 // pred_region
      %1061 = vsyncadd [#allocation20], 0
      %s1062 = sshll.u32 [#allocation19], 4
      %s1063 = int_to_ptr.vmem [resolvable:$true] %s1062
      %s1064 = sshll.u32 %s9, 4
      %s1065 = int_to_ptr.hbm [resolvable:$true] %s1064
      %1070 = dma.vmem_to_hbm [thread:$0]  %s1063, 512, %s1065, [#allocation20], 128, 128, 8
    $region77: #{tpu_custom_call.1} parent=1 // pred_fallthru
      _
    // Predicated region
    $region78: #{tpu_custom_call.1} parent=1 // pred_check
      _
    $region79: #{tpu_custom_call.1} parent=1 // pred_check_branch
      %1072 = sbr.rel (0) target = $region81
    $region80: #{tpu_custom_call.1} parent=1 // pred_region
      %1074 = vsyncadd [#allocation20], 0
      %s1075 = sshll.u32 [#allocation21], 4
      %s1076 = int_to_ptr.vmem [resolvable:$true] %s1075
      %s1077 = sshll.u32 %s10, 4
      %s1078 = int_to_ptr.hbm [resolvable:$true] %s1077
      %1083 = dma.vmem_to_hbm [thread:$0]  %s1076, 1024, %s1078, [#allocation20], 512, 512, 32
    $region81: #{tpu_custom_call.1} parent=1 // pred_fallthru
      _
    // Predicated region
    $region82: #{tpu_custom_call.1} parent=1 // pred_check
      _
    $region83: #{tpu_custom_call.1} parent=1 // pred_check_branch
      %1085 = sbr.rel (0) target = $region85
    $region84: #{tpu_custom_call.1} parent=1 // pred_region
      %1087 = vsyncadd [#allocation23], 0
      %s1088 = sshll.u32 [#allocation22], 4
      %s1089 = int_to_ptr.vmem [resolvable:$true] %s1088
      %s1090 = sshll.u32 %s11, 4
      %s1091 = int_to_ptr.hbm [resolvable:$true] %s1090
      %1096 = dma.vmem_to_hbm [thread:$0]  %s1089, 512, %s1091, [#allocation23], 128, 128, 8
    $region85: #{tpu_custom_call.1} parent=1 // pred_fallthru
      _
    // Predicated region
    $region86: #{tpu_custom_call.1} parent=1 // pred_check
      _
    $region87: #{tpu_custom_call.1} parent=1 // pred_check_branch
      %1098 = sbr.rel (0) target = $region89
    $region88: #{tpu_custom_call.1} parent=1 // pred_region
      %1100 = dma.done [#allocation6], 1024
    $region89: #{tpu_custom_call.1} parent=1 // pred_fallthru
      _
    // Predicated region
    $region90: #{tpu_custom_call.1} parent=1 // pred_check
      _
    $region91: #{tpu_custom_call.1} parent=1 // pred_check_branch
      %1102 = sbr.rel (0) target = $region93
    $region92: #{tpu_custom_call.1} parent=1 // pred_region
      %1104 = dma.done [#allocation20], 512
    $region93: #{tpu_custom_call.1} parent=1 // pred_fallthru
      _
    // Predicated region
    $region94: #{tpu_custom_call.1} parent=1 // pred_check
      _
    $region95: #{tpu_custom_call.1} parent=1 // pred_check_branch
      %1106 = sbr.rel (0) target = $region97
    $region96: #{tpu_custom_call.1} parent=1 // pred_region
      %1108 = dma.done [#allocation20], 1024
    $region97: #{tpu_custom_call.1} parent=1 // pred_fallthru
      _
    // Predicated region
    $region98: #{tpu_custom_call.1} parent=1 // pred_check
      _
    $region99: #{tpu_custom_call.1} parent=1 // pred_check_branch
      %1110 = sbr.rel (0) target = $region101
    $region100: #{tpu_custom_call.1} parent=1 // pred_region
      %1112 = dma.done [#allocation23], 512
    $region101: #{tpu_custom_call.1} parent=1 // pred_fallthru
      _
    %1113 = vsyncpa [#allocation5], 1
    %1114 = vsyncpa [#allocation8], 1
    %1115 = vsyncpa [#allocation11], 1
    %1116 = vsyncpa [#allocation14], 1
    %1117 = vsyncpa [#allocation17], 1
    %1118 = vsyncpa [#allocation6], 1
    %1119 = vsyncpa [#allocation20], 1
    %1120 = vsyncpa [#allocation23], 1

</llo_original>
